<compile_context>
chip_gen: v6e
topology: v6e:2x2x1
jax: 0.10.0
libtpu: 0.0.40
codegen_flags: <defaults>
</compile_context>

<pallas_src>
import functools

import numpy as np
import jax
import jax.numpy as jnp
from jax.experimental import pallas as pl
from jax.experimental.pallas import tpu as pltpu


def _layernorm(x, gamma, beta, eps=1e-12):
    # two-pass variance (matches torch.nn.LayerNorm / the reference exactly)
    mean = jnp.mean(x, axis=-1, keepdims=True)
    d = x - mean
    var = jnp.mean(d * d, axis=-1, keepdims=True)
    return d * jax.lax.rsqrt(var + eps) * gamma + beta


def encoder_kernel(x_ref, mask_ref,
                   wqkv_ref, bqkv_ref, wo_ref, bo_ref,
                   g1_ref, be1_ref, w1_ref, b1_ref, w2_ref, b2_ref,
                   g2_ref, be2_ref, o_ref, *, num_heads, use_bf16_matmul):
    """Grid = (batch blocks,).  One fused QKV projection, per-head attention,
    one output projection, LN -> FFN -> LN.  Dropout = identity (eval mode).
    The 1/sqrt(Dh) scale is already folded into the Q weight/bias host-side."""
    Bn, L, E = x_ref.shape
    H = num_heads
    Dh = E // H
    M = Bn * L
    mm_dtype = jnp.bfloat16 if use_bf16_matmul else jnp.float32

    x2d = x_ref[...].reshape(M, E)           # leading-dim merge only (no relayout)

    # Fused QKV projection: single lane-dense (M, E) @ (E, 3E) matmul.
    qkv = jnp.dot(x2d.astype(mm_dtype), wqkv_ref[...],
                  preferred_element_type=jnp.float32) + bqkv_ref[...]   # (M, 3E)

    mask = mask_ref[...]                      # (Bn, 1, L) additive key mask

    # Per-head attention (H is small & static; loop is unrolled at trace time).
    ctx_parts = []
    for h in range(H):
        lo = h * Dh
        qh = qkv[:, lo:lo + Dh].reshape(Bn, L, Dh)                 # scale pre-folded
        kh = qkv[:, E + lo:E + lo + Dh].reshape(Bn, L, Dh)
        vh = qkv[:, 2 * E + lo:2 * E + lo + Dh].reshape(Bn, L, Dh)

        s = jnp.einsum('bqd,bkd->bqk', qh.astype(mm_dtype), kh.astype(mm_dtype),
                       preferred_element_type=jnp.float32)          # (Bn, L, L)
        s = s + mask

        m = jnp.max(s, axis=-1, keepdims=True)
        p = jnp.exp(s - m)
        p = p / jnp.sum(p, axis=-1, keepdims=True)                  # exact softmax

        a = jnp.einsum('bqk,bkd->bqd', p.astype(mm_dtype), vh.astype(mm_dtype),
                       preferred_element_type=jnp.float32)          # (Bn, L, Dh)
        ctx_parts.append(a.reshape(M, Dh))

    ctx = jnp.concatenate(ctx_parts, axis=-1) if H > 1 else ctx_parts[0]   # (M, E)

    # Output projection + LayerNorm + FFN + LayerNorm.
    y = jnp.dot(ctx.astype(mm_dtype), wo_ref[...],
                preferred_element_type=jnp.float32) + bo_ref[...]
    y = _layernorm(y, g1_ref[...], be1_ref[...])

    h1 = jnp.maximum(jnp.dot(y.astype(mm_dtype), w1_ref[...],
                             preferred_element_type=jnp.float32) + b1_ref[...], 0.0)
    y2 = jnp.dot(h1.astype(mm_dtype), w2_ref[...],
                 preferred_element_type=jnp.float32) + b2_ref[...]
    # TODO(synk): nn.Dropout is stochastic in train mode; identity here (eval).
    y2 = _layernorm(y2, g2_ref[...], be2_ref[...])

    o_ref[...] = y2.reshape(Bn, L, E)


def encoder_forward(hiddens, attention_mask, params, *, num_heads,
                    use_bf16_matmul=True):
    """hiddens: (L, N, E) seq-first (PyTorch MHA default); attention_mask: (N, L)
    bool where True marks padded keys to ignore.  Returns (L, N, E) float32.
    use_bf16_matmul: bf16 MXU operands with f32 accumulation (recommended on
    v5e/v6e/v7x; ~1e-2-level numeric deltas)."""
    L, N, E = hiddens.shape
    H = num_heads
    assert E % H == 0
    Dh = E // H
    scale = 1.0 / float(np.sqrt(Dh))
    f32 = jnp.float32

    x = jnp.transpose(hiddens, (1, 0, 2)).astype(f32)                  # (N, L, E)
    add_mask = jnp.where(attention_mask, jnp.float32(-1e30),
                         jnp.float32(0.0)).reshape(N, 1, L)

    # Batch block: target ~256 rows/step (fills v6e/v7x MXU M dim), but keep
    # >=2 grid steps along the parallel batch axis so both v7x TCs get work.
    target_rows = 256
    Bn = max(1, min(N, target_rows // max(L, 1)))
    if N > 1 and -(-N // Bn) < 2:
        Bn = max(1, -(-N // 2))
    Np = -(-N // Bn) * Bn
    if Np != N:
        x = jnp.pad(x, ((0, Np - N), (0, 0), (0, 0)))
        add_mask = jnp.pad(add_mask, ((0, Np - N), (0, 0), (0, 0)))

    (wq, bq, wk, bk, wv, bv, wo, bo, g1, be1, w1, b1, w2, b2, g2, be2) = params
    I = w1.shape[0]
    w_dtype = jnp.bfloat16 if use_bf16_matmul else f32

    def vec(p):              # 1-D param -> (1, dim) VMEM-friendly 2-D ref
        return p.reshape(1, -1).astype(f32)

    # Fused QKV weight in (in, out) layout; 1/sqrt(Dh) folded into Q columns.
    wqkv_t = jnp.concatenate(
        [wq.astype(f32).T * scale, wk.astype(f32).T, wv.astype(f32).T],
        axis=1).astype(w_dtype)                                        # (E, 3E)
    bqkv = jnp.concatenate(
        [bq.astype(f32) * scale, bk.astype(f32), bv.astype(f32)]).reshape(1, 3 * E)
    wo_t = wo.astype(f32).T.astype(w_dtype)                            # (E, E)
    w1t = w1.astype(f32).T.astype(w_dtype)                             # (E, I)
    w2t = w2.astype(f32).T.astype(w_dtype)                             # (I, E)

    def inv(shape):          # grid-invariant block (not re-DMA'd across steps)
        return pl.BlockSpec(shape, lambda b: (0,) * len(shape))

    in_specs = [
        pl.BlockSpec((Bn, L, E), lambda b: (b, 0, 0)),    # hiddens block
        pl.BlockSpec((Bn, 1, L), lambda b: (b, 0, 0)),    # additive key mask block
        inv((E, 3 * E)), inv((1, 3 * E)),                 # fused Wqkv, bqkv
        inv((E, E)), inv((1, E)),                         # Wo, bo
        inv((1, E)), inv((1, E)),                         # norm1 gamma/beta
        inv((E, I)), inv((1, I)),                         # FFN W1.T, b1
        inv((I, E)), inv((1, E)),                         # FFN W2.T, b2
        inv((1, E)), inv((1, E)),                         # norm2 gamma/beta
    ]

    out = pl.pallas_call(
        functools.partial(encoder_kernel, num_heads=H,
                          use_bf16_matmul=use_bf16_matmul),
        out_shape=jax.ShapeDtypeStruct((Np, L, E), jnp.float32),
        grid=(Np // Bn,),
        in_specs=in_specs,
        out_specs=pl.BlockSpec((Bn, L, E), lambda b: (b, 0, 0)),
        compiler_params=pltpu.CompilerParams(
            dimension_semantics=("parallel",),
            # v7x has only 64 MiB VMEM per TensorCore; leave headroom.
            vmem_limit_bytes=48 * 1024 * 1024),
    )(x, add_mask,
      wqkv_t, bqkv, wo_t, vec(bo), vec(g1), vec(be1),
      w1t, vec(b1), w2t, vec(b2), vec(g2), vec(be2))

    out = out[:N]
    return jnp.transpose(out, (1, 0, 2))                  # back to (L, N, E)


def encoder_reference(hiddens, attention_mask, params, *, num_heads):
    """Pure-JAX reference mirroring the PyTorch forward (eval mode)."""
    (wq, bq, wk, bk, wv, bv, wo, bo, g1, be1, w1, b1, w2, b2, g2, be2) = params
    L, N, E = hiddens.shape
    Dh = E // num_heads
    x = jnp.transpose(hiddens, (1, 0, 2))                 # (N, L, E)
    q, k, v = x @ wq.T + bq, x @ wk.T + bk, x @ wv.T + bv

    def split(t):
        return t.reshape(N, L, num_heads, Dh).transpose(0, 2, 1, 3)   # (N, H, L, Dh)

    qh, kh, vh = split(q), split(k), split(v)
    s = jnp.einsum('nhld,nhmd->nhlm', qh, kh) / np.sqrt(Dh)
    s = s + jnp.where(attention_mask, -1e30, 0.0)[:, None, None, :]
    p = jax.nn.softmax(s, axis=-1)
    a = jnp.einsum('nhlm,nhmd->nhld', p, vh).transpose(0, 2, 1, 3).reshape(N, L, E)
    y = a @ wo.T + bo

    def ln(t, g, b):
        mean = t.mean(-1, keepdims=True)
        var = ((t - mean) ** 2).mean(-1, keepdims=True)
        return (t - mean) / jnp.sqrt(var + 1e-12) * g + b

    y = ln(y, g1, be1)
    h1 = jax.nn.relu(y @ w1.T + b1)
    y2 = h1 @ w2.T + b2
    y2 = ln(y2, g2, be2)
    return jnp.transpose(y2, (1, 0, 2))


def init_params(key, hidden_dim, intermediate_dim):
    ks = jax.random.split(key, 12)
    E, I = hidden_dim, intermediate_dim
    nrm = lambda k, s: (0.05 * jax.random.normal(k, s, jnp.float32))
    wq, wk, wv, wo = nrm(ks[0], (E, E)), nrm(ks[1], (E, E)), nrm(ks[2], (E, E)), nrm(ks[3], (E, E))
    bq, bk, bv, bo = nrm(ks[4], (E,)), nrm(ks[5], (E,)), nrm(ks[6], (E,)), nrm(ks[7], (E,))
    w1, b1 = nrm(ks[8], (I, E)), nrm(ks[9], (I,))
    w2, b2 = nrm(ks[10], (E, I)), nrm(ks[11], (E,))
    g1, be1 = jnp.ones((E,), jnp.float32), jnp.zeros((E,), jnp.float32)
    g2, be2 = jnp.ones((E,), jnp.float32), jnp.zeros((E,), jnp.float32)
    return (wq, bq, wk, bk, wv, bv, wo, bo, g1, be1, w1, b1, w2, b2, g2, be2)


if __name__ == "__main__":
    L, N, E, H, I = 8, 2, 32, 4, 64   # seq, batch, hidden_dim, num_heads, intermediate_dim
    key = jax.random.PRNGKey(0)
    k_x, k_p = jax.random.split(key)

    hiddens = jax.random.normal(k_x, (L, N, E), jnp.float32)          # (seq, batch, hidden)
    attention_mask = jnp.array(
        [[False] * L,
         [False] * (L - 2) + [True] * 2], dtype=bool)                 # (batch, seq), True = pad
    params = init_params(k_p, E, I)

    ref = encoder_reference(hiddens, attention_mask, params, num_heads=H)

    # f32 MXU-operand path: exact softmax + two-pass LN -> matches the reference
    # closely (tolerance covers TPU default-precision f32 matmul emulation).
    out = jax.block_until_ready(
        encoder_forward(hiddens, attention_mask, params, num_heads=H,
                        use_bf16_matmul=False))
    np.testing.assert_allclose(np.asarray(out), np.asarray(ref),
                               rtol=1e-2, atol=1e-2)

    # bf16 MXU-operand path (throughput mode recommended on v5e/v6e/v7x);
    # coarse sanity check only — bf16 operands introduce ~1e-2-level deltas.
    out_bf16 = jax.block_until_ready(
        encoder_forward(hiddens, attention_mask, params, num_heads=H,
                        use_bf16_matmul=True))
    assert bool(jnp.all(jnp.isfinite(out_bf16)))
    np.testing.assert_allclose(np.asarray(out_bf16), np.asarray(ref),
                               rtol=2e-1, atol=2e-1)

    print("KERNEL_OK")
</pallas_src>

<mosaic_0001>
module attributes {stable_mosaic.version = 11 : i64} {
  func.func @encoder_kernel(%arg0: i32, %arg1: memref<1x8x32xf32, #tpu.memory_space<vmem>>, %arg2: memref<1x1x8xf32, #tpu.memory_space<vmem>>, %arg3: memref<32x96xf32, #tpu.memory_space<vmem>>, %arg4: memref<1x96xf32, #tpu.memory_space<vmem>>, %arg5: memref<32x32xf32, #tpu.memory_space<vmem>>, %arg6: memref<1x32xf32, #tpu.memory_space<vmem>>, %arg7: memref<1x32xf32, #tpu.memory_space<vmem>>, %arg8: memref<1x32xf32, #tpu.memory_space<vmem>>, %arg9: memref<32x64xf32, #tpu.memory_space<vmem>>, %arg10: memref<1x64xf32, #tpu.memory_space<vmem>>, %arg11: memref<64x32xf32, #tpu.memory_space<vmem>>, %arg12: memref<1x32xf32, #tpu.memory_space<vmem>>, %arg13: memref<1x32xf32, #tpu.memory_space<vmem>>, %arg14: memref<1x32xf32, #tpu.memory_space<vmem>>, %arg15: memref<1x8x32xf32, #tpu.memory_space<vmem>>) attributes {dimension_semantics = [#tpu.dimension_semantics<parallel>], iteration_bounds = array<i64: 2>, scalar_prefetch = 0 : i64, scratch_operands = 0 : i64, tpu.core_type = #tpu.core_type<tc>, window_params = [{transform_indices = @transform_0, window_bounds = array<i64: 1, 8, 32>}, {transform_indices = @transform_1, window_bounds = array<i64: 1, 1, 8>}, {pipeline_mode = #tpu.pipeline_mode<synchronous>, transform_indices = @transform_2, window_bounds = array<i64: 32, 96>}, {pipeline_mode = #tpu.pipeline_mode<synchronous>, transform_indices = @transform_3, window_bounds = array<i64: 1, 96>}, {pipeline_mode = #tpu.pipeline_mode<synchronous>, transform_indices = @transform_4, window_bounds = array<i64: 32, 32>}, {pipeline_mode = #tpu.pipeline_mode<synchronous>, transform_indices = @transform_5, window_bounds = array<i64: 1, 32>}, {pipeline_mode = #tpu.pipeline_mode<synchronous>, transform_indices = @transform_6, window_bounds = array<i64: 1, 32>}, {pipeline_mode = #tpu.pipeline_mode<synchronous>, transform_indices = @transform_7, window_bounds = array<i64: 1, 32>}, {pipeline_mode = #tpu.pipeline_mode<synchronous>, transform_indices = @transform_8, window_bounds = array<i64: 32, 64>}, {pipeline_mode = #tpu.pipeline_mode<synchronous>, transform_indices = @transform_9, window_bounds = array<i64: 1, 64>}, {pipeline_mode = #tpu.pipeline_mode<synchronous>, transform_indices = @transform_10, window_bounds = array<i64: 64, 32>}, {pipeline_mode = #tpu.pipeline_mode<synchronous>, transform_indices = @transform_11, window_bounds = array<i64: 1, 32>}, {pipeline_mode = #tpu.pipeline_mode<synchronous>, transform_indices = @transform_12, window_bounds = array<i64: 1, 32>}, {pipeline_mode = #tpu.pipeline_mode<synchronous>, transform_indices = @transform_13, window_bounds = array<i64: 1, 32>}, {transform_indices = @transform_14, window_bounds = array<i64: 1, 8, 32>}]} {
    %c0 = arith.constant 0 : index
    %c0_0 = arith.constant 0 : index
    %c0_1 = arith.constant 0 : index
    %0 = vector.load %arg1[%c0, %c0_0, %c0_1] : memref<1x8x32xf32, #tpu.memory_space<vmem>>, vector<1x8x32xf32>
    %1 = vector.shape_cast %0 : vector<1x8x32xf32> to vector<8x32xf32>
    %c0_2 = arith.constant 0 : index
    %c0_3 = arith.constant 0 : index
    %2 = vector.load %arg3[%c0_2, %c0_3] : memref<32x96xf32, #tpu.memory_space<vmem>>, vector<32x96xf32>
    %cst = arith.constant dense<0.000000e+00> : vector<8x96xf32>
    %3 = tpu.matmul %1, %2, %cst {dimension_numbers = #tpu.dot_dimension_numbers<[1], [0], [0], [1], [0, 0, 1, 1], [], []>} : vector<8x32xf32>, vector<32x96xf32>, vector<8x96xf32> -> vector<8x96xf32>
    %c0_4 = arith.constant 0 : index
    %c0_5 = arith.constant 0 : index
    %4 = vector.load %arg4[%c0_4, %c0_5] : memref<1x96xf32, #tpu.memory_space<vmem>>, vector<1x96xf32>
    %5 = vector.broadcast %4 : vector<1x96xf32> to vector<8x96xf32>
    %6 = arith.addf %3, %5 : vector<8x96xf32>
    %c0_6 = arith.constant 0 : index
    %c0_7 = arith.constant 0 : index
    %c0_8 = arith.constant 0 : index
    %7 = vector.load %arg2[%c0_6, %c0_7, %c0_8] : memref<1x1x8xf32, #tpu.memory_space<vmem>>, vector<1x1x8xf32>
    %8 = vector.extract_strided_slice %6 {offsets = [0, 0], sizes = [8, 8], strides = [1, 1]} : vector<8x96xf32> to vector<8x8xf32>
    %9 = vector.shape_cast %8 : vector<8x8xf32> to vector<1x8x8xf32>
    %10 = vector.extract_strided_slice %6 {offsets = [0, 32], sizes = [8, 8], strides = [1, 1]} : vector<8x96xf32> to vector<8x8xf32>
    %11 = vector.shape_cast %10 : vector<8x8xf32> to vector<1x8x8xf32>
    %12 = vector.extract_strided_slice %6 {offsets = [0, 64], sizes = [8, 8], strides = [1, 1]} : vector<8x96xf32> to vector<8x8xf32>
    %13 = vector.shape_cast %12 : vector<8x8xf32> to vector<1x8x8xf32>
    "tpu.trace_start"() <{level = 10 : i32, message = "bqd,bkd->bqk"}> : () -> ()
    %cst_9 = arith.constant dense<0.000000e+00> : vector<1x8x8xf32>
    %14 = tpu.matmul %9, %11, %cst_9 {dimension_numbers = #tpu.dot_dimension_numbers<[2], [2], [1], [1], [0, 0, 0, 1, 1, 1], [0], [0]>} : vector<1x8x8xf32>, vector<1x8x8xf32>, vector<1x8x8xf32> -> vector<1x8x8xf32>
    "tpu.trace_stop"() : () -> ()
    %15 = vector.broadcast %7 : vector<1x1x8xf32> to vector<1x8x8xf32>
    %16 = arith.addf %14, %15 : vector<1x8x8xf32>
    %cst_10 = arith.constant dense<0xFF800000> : vector<1x8xf32>
    %17 = vector.multi_reduction <maximumf>, %16, %cst_10 [2] : vector<1x8x8xf32> to vector<1x8xf32>
    %18 = vector.shape_cast %17 : vector<1x8xf32> to vector<1x8x1xf32>
    %19 = vector.broadcast %18 : vector<1x8x1xf32> to vector<1x8x8xf32>
    %20 = arith.subf %16, %19 : vector<1x8x8xf32>
    %21 = math.exp %20 : vector<1x8x8xf32>
    %cst_11 = arith.constant dense<0.000000e+00> : vector<1x8xf32>
    %22 = vector.multi_reduction <add>, %21, %cst_11 [2] : vector<1x8x8xf32> to vector<1x8xf32>
    %23 = vector.shape_cast %22 : vector<1x8xf32> to vector<1x8x1xf32>
    %24 = vector.broadcast %23 : vector<1x8x1xf32> to vector<1x8x8xf32>
    %25 = arith.divf %21, %24 : vector<1x8x8xf32>
    "tpu.trace_start"() <{level = 10 : i32, message = "bqk,bkd->bqd"}> : () -> ()
    %cst_12 = arith.constant dense<0.000000e+00> : vector<1x8x8xf32>
    %26 = tpu.matmul %25, %13, %cst_12 {dimension_numbers = #tpu.dot_dimension_numbers<[2], [1], [1], [2], [0, 0, 0, 1, 1, 2], [0], [0]>} : vector<1x8x8xf32>, vector<1x8x8xf32>, vector<1x8x8xf32> -> vector<1x8x8xf32>
    "tpu.trace_stop"() : () -> ()
    %27 = vector.shape_cast %26 : vector<1x8x8xf32> to vector<8x8xf32>
    %28 = vector.extract_strided_slice %6 {offsets = [0, 8], sizes = [8, 8], strides = [1, 1]} : vector<8x96xf32> to vector<8x8xf32>
    %29 = vector.shape_cast %28 : vector<8x8xf32> to vector<1x8x8xf32>
    %30 = vector.extract_strided_slice %6 {offsets = [0, 40], sizes = [8, 8], strides = [1, 1]} : vector<8x96xf32> to vector<8x8xf32>
    %31 = vector.shape_cast %30 : vector<8x8xf32> to vector<1x8x8xf32>
    %32 = vector.extract_strided_slice %6 {offsets = [0, 72], sizes = [8, 8], strides = [1, 1]} : vector<8x96xf32> to vector<8x8xf32>
    %33 = vector.shape_cast %32 : vector<8x8xf32> to vector<1x8x8xf32>
    "tpu.trace_start"() <{level = 10 : i32, message = "bqd,bkd->bqk"}> : () -> ()
    %cst_13 = arith.constant dense<0.000000e+00> : vector<1x8x8xf32>
    %34 = tpu.matmul %29, %31, %cst_13 {dimension_numbers = #tpu.dot_dimension_numbers<[2], [2], [1], [1], [0, 0, 0, 1, 1, 1], [0], [0]>} : vector<1x8x8xf32>, vector<1x8x8xf32>, vector<1x8x8xf32> -> vector<1x8x8xf32>
    "tpu.trace_stop"() : () -> ()
    %35 = vector.broadcast %7 : vector<1x1x8xf32> to vector<1x8x8xf32>
    %36 = arith.addf %34, %35 : vector<1x8x8xf32>
    %cst_14 = arith.constant dense<0xFF800000> : vector<1x8xf32>
    %37 = vector.multi_reduction <maximumf>, %36, %cst_14 [2] : vector<1x8x8xf32> to vector<1x8xf32>
    %38 = vector.shape_cast %37 : vector<1x8xf32> to vector<1x8x1xf32>
    %39 = vector.broadcast %38 : vector<1x8x1xf32> to vector<1x8x8xf32>
    %40 = arith.subf %36, %39 : vector<1x8x8xf32>
    %41 = math.exp %40 : vector<1x8x8xf32>
    %cst_15 = arith.constant dense<0.000000e+00> : vector<1x8xf32>
    %42 = vector.multi_reduction <add>, %41, %cst_15 [2] : vector<1x8x8xf32> to vector<1x8xf32>
    %43 = vector.shape_cast %42 : vector<1x8xf32> to vector<1x8x1xf32>
    %44 = vector.broadcast %43 : vector<1x8x1xf32> to vector<1x8x8xf32>
    %45 = arith.divf %41, %44 : vector<1x8x8xf32>
    "tpu.trace_start"() <{level = 10 : i32, message = "bqk,bkd->bqd"}> : () -> ()
    %cst_16 = arith.constant dense<0.000000e+00> : vector<1x8x8xf32>
    %46 = tpu.matmul %45, %33, %cst_16 {dimension_numbers = #tpu.dot_dimension_numbers<[2], [1], [1], [2], [0, 0, 0, 1, 1, 2], [0], [0]>} : vector<1x8x8xf32>, vector<1x8x8xf32>, vector<1x8x8xf32> -> vector<1x8x8xf32>
    "tpu.trace_stop"() : () -> ()
    %47 = vector.shape_cast %46 : vector<1x8x8xf32> to vector<8x8xf32>
    %48 = vector.extract_strided_slice %6 {offsets = [0, 16], sizes = [8, 8], strides = [1, 1]} : vector<8x96xf32> to vector<8x8xf32>
    %49 = vector.shape_cast %48 : vector<8x8xf32> to vector<1x8x8xf32>
    %50 = vector.extract_strided_slice %6 {offsets = [0, 48], sizes = [8, 8], strides = [1, 1]} : vector<8x96xf32> to vector<8x8xf32>
    %51 = vector.shape_cast %50 : vector<8x8xf32> to vector<1x8x8xf32>
    %52 = vector.extract_strided_slice %6 {offsets = [0, 80], sizes = [8, 8], strides = [1, 1]} : vector<8x96xf32> to vector<8x8xf32>
    %53 = vector.shape_cast %52 : vector<8x8xf32> to vector<1x8x8xf32>
    "tpu.trace_start"() <{level = 10 : i32, message = "bqd,bkd->bqk"}> : () -> ()
    %cst_17 = arith.constant dense<0.000000e+00> : vector<1x8x8xf32>
    %54 = tpu.matmul %49, %51, %cst_17 {dimension_numbers = #tpu.dot_dimension_numbers<[2], [2], [1], [1], [0, 0, 0, 1, 1, 1], [0], [0]>} : vector<1x8x8xf32>, vector<1x8x8xf32>, vector<1x8x8xf32> -> vector<1x8x8xf32>
    "tpu.trace_stop"() : () -> ()
    %55 = vector.broadcast %7 : vector<1x1x8xf32> to vector<1x8x8xf32>
    %56 = arith.addf %54, %55 : vector<1x8x8xf32>
    %cst_18 = arith.constant dense<0xFF800000> : vector<1x8xf32>
    %57 = vector.multi_reduction <maximumf>, %56, %cst_18 [2] : vector<1x8x8xf32> to vector<1x8xf32>
    %58 = vector.shape_cast %57 : vector<1x8xf32> to vector<1x8x1xf32>
    %59 = vector.broadcast %58 : vector<1x8x1xf32> to vector<1x8x8xf32>
    %60 = arith.subf %56, %59 : vector<1x8x8xf32>
    %61 = math.exp %60 : vector<1x8x8xf32>
    %cst_19 = arith.constant dense<0.000000e+00> : vector<1x8xf32>
    %62 = vector.multi_reduction <add>, %61, %cst_19 [2] : vector<1x8x8xf32> to vector<1x8xf32>
    %63 = vector.shape_cast %62 : vector<1x8xf32> to vector<1x8x1xf32>
    %64 = vector.broadcast %63 : vector<1x8x1xf32> to vector<1x8x8xf32>
    %65 = arith.divf %61, %64 : vector<1x8x8xf32>
    "tpu.trace_start"() <{level = 10 : i32, message = "bqk,bkd->bqd"}> : () -> ()
    %cst_20 = arith.constant dense<0.000000e+00> : vector<1x8x8xf32>
    %66 = tpu.matmul %65, %53, %cst_20 {dimension_numbers = #tpu.dot_dimension_numbers<[2], [1], [1], [2], [0, 0, 0, 1, 1, 2], [0], [0]>} : vector<1x8x8xf32>, vector<1x8x8xf32>, vector<1x8x8xf32> -> vector<1x8x8xf32>
    "tpu.trace_stop"() : () -> ()
    %67 = vector.shape_cast %66 : vector<1x8x8xf32> to vector<8x8xf32>
    %68 = vector.extract_strided_slice %6 {offsets = [0, 24], sizes = [8, 8], strides = [1, 1]} : vector<8x96xf32> to vector<8x8xf32>
    %69 = vector.shape_cast %68 : vector<8x8xf32> to vector<1x8x8xf32>
    %70 = vector.extract_strided_slice %6 {offsets = [0, 56], sizes = [8, 8], strides = [1, 1]} : vector<8x96xf32> to vector<8x8xf32>
    %71 = vector.shape_cast %70 : vector<8x8xf32> to vector<1x8x8xf32>
    %72 = vector.extract_strided_slice %6 {offsets = [0, 88], sizes = [8, 8], strides = [1, 1]} : vector<8x96xf32> to vector<8x8xf32>
    %73 = vector.shape_cast %72 : vector<8x8xf32> to vector<1x8x8xf32>
    "tpu.trace_start"() <{level = 10 : i32, message = "bqd,bkd->bqk"}> : () -> ()
    %cst_21 = arith.constant dense<0.000000e+00> : vector<1x8x8xf32>
    %74 = tpu.matmul %69, %71, %cst_21 {dimension_numbers = #tpu.dot_dimension_numbers<[2], [2], [1], [1], [0, 0, 0, 1, 1, 1], [0], [0]>} : vector<1x8x8xf32>, vector<1x8x8xf32>, vector<1x8x8xf32> -> vector<1x8x8xf32>
    "tpu.trace_stop"() : () -> ()
    %75 = vector.broadcast %7 : vector<1x1x8xf32> to vector<1x8x8xf32>
    %76 = arith.addf %74, %75 : vector<1x8x8xf32>
    %cst_22 = arith.constant dense<0xFF800000> : vector<1x8xf32>
    %77 = vector.multi_reduction <maximumf>, %76, %cst_22 [2] : vector<1x8x8xf32> to vector<1x8xf32>
    %78 = vector.shape_cast %77 : vector<1x8xf32> to vector<1x8x1xf32>
    %79 = vector.broadcast %78 : vector<1x8x1xf32> to vector<1x8x8xf32>
    %80 = arith.subf %76, %79 : vector<1x8x8xf32>
    %81 = math.exp %80 : vector<1x8x8xf32>
    %cst_23 = arith.constant dense<0.000000e+00> : vector<1x8xf32>
    %82 = vector.multi_reduction <add>, %81, %cst_23 [2] : vector<1x8x8xf32> to vector<1x8xf32>
    %83 = vector.shape_cast %82 : vector<1x8xf32> to vector<1x8x1xf32>
    %84 = vector.broadcast %83 : vector<1x8x1xf32> to vector<1x8x8xf32>
    %85 = arith.divf %81, %84 : vector<1x8x8xf32>
    "tpu.trace_start"() <{level = 10 : i32, message = "bqk,bkd->bqd"}> : () -> ()
    %cst_24 = arith.constant dense<0.000000e+00> : vector<1x8x8xf32>
    %86 = tpu.matmul %85, %73, %cst_24 {dimension_numbers = #tpu.dot_dimension_numbers<[2], [1], [1], [2], [0, 0, 0, 1, 1, 2], [0], [0]>} : vector<1x8x8xf32>, vector<1x8x8xf32>, vector<1x8x8xf32> -> vector<1x8x8xf32>
    "tpu.trace_stop"() : () -> ()
    %87 = vector.shape_cast %86 : vector<1x8x8xf32> to vector<8x8xf32>
    %88 = tpu.concatenate %27, %47, %67, %87 in 1 : vector<8x8xf32>, vector<8x8xf32>, vector<8x8xf32>, vector<8x8xf32> -> vector<8x32xf32>
    %c0_25 = arith.constant 0 : index
    %c0_26 = arith.constant 0 : index
    %89 = vector.load %arg5[%c0_25, %c0_26] : memref<32x32xf32, #tpu.memory_space<vmem>>, vector<32x32xf32>
    %cst_27 = arith.constant dense<0.000000e+00> : vector<8x32xf32>
    %90 = tpu.matmul %88, %89, %cst_27 {dimension_numbers = #tpu.dot_dimension_numbers<[1], [0], [0], [1], [0, 0, 1, 1], [], []>} : vector<8x32xf32>, vector<32x32xf32>, vector<8x32xf32> -> vector<8x32xf32>
    %c0_28 = arith.constant 0 : index
    %c0_29 = arith.constant 0 : index
    %91 = vector.load %arg6[%c0_28, %c0_29] : memref<1x32xf32, #tpu.memory_space<vmem>>, vector<1x32xf32>
    %92 = vector.broadcast %91 : vector<1x32xf32> to vector<8x32xf32>
    %93 = arith.addf %90, %92 : vector<8x32xf32>
    %c0_30 = arith.constant 0 : index
    %c0_31 = arith.constant 0 : index
    %94 = vector.load %arg7[%c0_30, %c0_31] : memref<1x32xf32, #tpu.memory_space<vmem>>, vector<1x32xf32>
    %c0_32 = arith.constant 0 : index
    %c0_33 = arith.constant 0 : index
    %95 = vector.load %arg8[%c0_32, %c0_33] : memref<1x32xf32, #tpu.memory_space<vmem>>, vector<1x32xf32>
    %cst_34 = arith.constant dense<0.000000e+00> : vector<8xf32>
    %96 = vector.multi_reduction <add>, %93, %cst_34 [1] : vector<8x32xf32> to vector<8xf32>
    %97 = vector.shape_cast %96 : vector<8xf32> to vector<8x1xf32>
    %cst_35 = arith.constant 3.200000e+01 : f32
    %98 = vector.broadcast %cst_35 : f32 to vector<8x1xf32>
    %99 = arith.divf %97, %98 : vector<8x1xf32>
    %100 = vector.broadcast %99 : vector<8x1xf32> to vector<8x32xf32>
    %101 = arith.subf %93, %100 : vector<8x32xf32>
    %102 = arith.mulf %101, %101 : vector<8x32xf32>
    %cst_36 = arith.constant dense<0.000000e+00> : vector<8xf32>
    %103 = vector.multi_reduction <add>, %102, %cst_36 [1] : vector<8x32xf32> to vector<8xf32>
    %104 = vector.shape_cast %103 : vector<8xf32> to vector<8x1xf32>
    %cst_37 = arith.constant 3.200000e+01 : f32
    %105 = vector.broadcast %cst_37 : f32 to vector<8x1xf32>
    %106 = arith.divf %104, %105 : vector<8x1xf32>
    %cst_38 = arith.constant 9.99999996E-13 : f32
    %107 = vector.broadcast %cst_38 : f32 to vector<8x1xf32>
    %108 = arith.addf %106, %107 : vector<8x1xf32>
    %109 = math.rsqrt %108 : vector<8x1xf32>
    %110 = vector.broadcast %109 : vector<8x1xf32> to vector<8x32xf32>
    %111 = arith.mulf %101, %110 : vector<8x32xf32>
    %112 = vector.broadcast %94 : vector<1x32xf32> to vector<8x32xf32>
    %113 = arith.mulf %111, %112 : vector<8x32xf32>
    %114 = vector.broadcast %95 : vector<1x32xf32> to vector<8x32xf32>
    %115 = arith.addf %113, %114 : vector<8x32xf32>
    %c0_39 = arith.constant 0 : index
    %c0_40 = arith.constant 0 : index
    %116 = vector.load %arg9[%c0_39, %c0_40] : memref<32x64xf32, #tpu.memory_space<vmem>>, vector<32x64xf32>
    %cst_41 = arith.constant dense<0.000000e+00> : vector<8x64xf32>
    %117 = tpu.matmul %115, %116, %cst_41 {dimension_numbers = #tpu.dot_dimension_numbers<[1], [0], [0], [1], [0, 0, 1, 1], [], []>} : vector<8x32xf32>, vector<32x64xf32>, vector<8x64xf32> -> vector<8x64xf32>
    %c0_42 = arith.constant 0 : index
    %c0_43 = arith.constant 0 : index
    %118 = vector.load %arg10[%c0_42, %c0_43] : memref<1x64xf32, #tpu.memory_space<vmem>>, vector<1x64xf32>
    %119 = vector.broadcast %118 : vector<1x64xf32> to vector<8x64xf32>
    %120 = arith.addf %117, %119 : vector<8x64xf32>
    %cst_44 = arith.constant 0.000000e+00 : f32
    %121 = vector.broadcast %cst_44 : f32 to vector<8x64xf32>
    %122 = arith.maximumf %120, %121 : vector<8x64xf32>
    %c0_45 = arith.constant 0 : index
    %c0_46 = arith.constant 0 : index
    %123 = vector.load %arg11[%c0_45, %c0_46] : memref<64x32xf32, #tpu.memory_space<vmem>>, vector<64x32xf32>
    %cst_47 = arith.constant dense<0.000000e+00> : vector<8x32xf32>
    %124 = tpu.matmul %122, %123, %cst_47 {dimension_numbers = #tpu.dot_dimension_numbers<[1], [0], [0], [1], [0, 0, 1, 1], [], []>} : vector<8x64xf32>, vector<64x32xf32>, vector<8x32xf32> -> vector<8x32xf32>
    %c0_48 = arith.constant 0 : index
    %c0_49 = arith.constant 0 : index
    %125 = vector.load %arg12[%c0_48, %c0_49] : memref<1x32xf32, #tpu.memory_space<vmem>>, vector<1x32xf32>
    %126 = vector.broadcast %125 : vector<1x32xf32> to vector<8x32xf32>
    %127 = arith.addf %124, %126 : vector<8x32xf32>
    %c0_50 = arith.constant 0 : index
    %c0_51 = arith.constant 0 : index
    %128 = vector.load %arg13[%c0_50, %c0_51] : memref<1x32xf32, #tpu.memory_space<vmem>>, vector<1x32xf32>
    %c0_52 = arith.constant 0 : index
    %c0_53 = arith.constant 0 : index
    %129 = vector.load %arg14[%c0_52, %c0_53] : memref<1x32xf32, #tpu.memory_space<vmem>>, vector<1x32xf32>
    %cst_54 = arith.constant dense<0.000000e+00> : vector<8xf32>
    %130 = vector.multi_reduction <add>, %127, %cst_54 [1] : vector<8x32xf32> to vector<8xf32>
    %131 = vector.shape_cast %130 : vector<8xf32> to vector<8x1xf32>
    %cst_55 = arith.constant 3.200000e+01 : f32
    %132 = vector.broadcast %cst_55 : f32 to vector<8x1xf32>
    %133 = arith.divf %131, %132 : vector<8x1xf32>
    %134 = vector.broadcast %133 : vector<8x1xf32> to vector<8x32xf32>
    %135 = arith.subf %127, %134 : vector<8x32xf32>
    %136 = arith.mulf %135, %135 : vector<8x32xf32>
    %cst_56 = arith.constant dense<0.000000e+00> : vector<8xf32>
    %137 = vector.multi_reduction <add>, %136, %cst_56 [1] : vector<8x32xf32> to vector<8xf32>
    %138 = vector.shape_cast %137 : vector<8xf32> to vector<8x1xf32>
    %cst_57 = arith.constant 3.200000e+01 : f32
    %139 = vector.broadcast %cst_57 : f32 to vector<8x1xf32>
    %140 = arith.divf %138, %139 : vector<8x1xf32>
    %cst_58 = arith.constant 9.99999996E-13 : f32
    %141 = vector.broadcast %cst_58 : f32 to vector<8x1xf32>
    %142 = arith.addf %140, %141 : vector<8x1xf32>
    %143 = math.rsqrt %142 : vector<8x1xf32>
    %144 = vector.broadcast %143 : vector<8x1xf32> to vector<8x32xf32>
    %145 = arith.mulf %135, %144 : vector<8x32xf32>
    %146 = vector.broadcast %128 : vector<1x32xf32> to vector<8x32xf32>
    %147 = arith.mulf %145, %146 : vector<8x32xf32>
    %148 = vector.broadcast %129 : vector<1x32xf32> to vector<8x32xf32>
    %149 = arith.addf %147, %148 : vector<8x32xf32>
    %150 = vector.shape_cast %149 : vector<8x32xf32> to vector<1x8x32xf32>
    %c0_59 = arith.constant 0 : index
    %c0_60 = arith.constant 0 : index
    %c0_61 = arith.constant 0 : index
    %151 = vector.load %arg15[%c0_59, %c0_60, %c0_61] : memref<1x8x32xf32, #tpu.memory_space<vmem>>, vector<1x8x32xf32>
    tpu.vector_store %arg15[%c0_59, %c0_60, %c0_61], %150 {strides = array<i32>} : memref<1x8x32xf32, #tpu.memory_space<vmem>>, vector<1x8x32xf32>,
    return
  }
  func.func @transform_0(%arg0: i32) -> (i32, i32, i32) {
    %c0_i32 = arith.constant 0 : i32
    %c0_i32_0 = arith.constant 0 : i32
    %c0_i32_1 = arith.constant 0 : i32
    return %arg0, %c0_i32, %c0_i32_0 : i32, i32, i32
  }
  func.func @transform_1(%arg0: i32) -> (i32, i32, i32) {
    %c0_i32 = arith.constant 0 : i32
    %c0_i32_0 = arith.constant 0 : i32
    %c0_i32_1 = arith.constant 0 : i32
    return %arg0, %c0_i32, %c0_i32_0 : i32, i32, i32
  }
  func.func @transform_2(%arg0: i32) -> (i32, i32) {
    %c0_i32 = arith.constant 0 : i32
    %c0_i32_0 = arith.constant 0 : i32
    %c0_i32_1 = arith.constant 0 : i32
    return %c0_i32, %c0_i32_0 : i32, i32
  }
  func.func @transform_3(%arg0: i32) -> (i32, i32) {
    %c0_i32 = arith.constant 0 : i32
    %c0_i32_0 = arith.constant 0 : i32
    %c0_i32_1 = arith.constant 0 : i32
    return %c0_i32, %c0_i32_0 : i32, i32
  }
  func.func @transform_4(%arg0: i32) -> (i32, i32) {
    %c0_i32 = arith.constant 0 : i32
    %c0_i32_0 = arith.constant 0 : i32
    %c0_i32_1 = arith.constant 0 : i32
    return %c0_i32, %c0_i32_0 : i32, i32
  }
  func.func @transform_5(%arg0: i32) -> (i32, i32) {
    %c0_i32 = arith.constant 0 : i32
    %c0_i32_0 = arith.constant 0 : i32
    %c0_i32_1 = arith.constant 0 : i32
    return %c0_i32, %c0_i32_0 : i32, i32
  }
  func.func @transform_6(%arg0: i32) -> (i32, i32) {
    %c0_i32 = arith.constant 0 : i32
    %c0_i32_0 = arith.constant 0 : i32
    %c0_i32_1 = arith.constant 0 : i32
    return %c0_i32, %c0_i32_0 : i32, i32
  }
  func.func @transform_7(%arg0: i32) -> (i32, i32) {
    %c0_i32 = arith.constant 0 : i32
    %c0_i32_0 = arith.constant 0 : i32
    %c0_i32_1 = arith.constant 0 : i32
    return %c0_i32, %c0_i32_0 : i32, i32
  }
  func.func @transform_8(%arg0: i32) -> (i32, i32) {
    %c0_i32 = arith.constant 0 : i32
    %c0_i32_0 = arith.constant 0 : i32
    %c0_i32_1 = arith.constant 0 : i32
    return %c0_i32, %c0_i32_0 : i32, i32
  }
  func.func @transform_9(%arg0: i32) -> (i32, i32) {
    %c0_i32 = arith.constant 0 : i32
    %c0_i32_0 = arith.constant 0 : i32
    %c0_i32_1 = arith.constant 0 : i32
    return %c0_i32, %c0_i32_0 : i32, i32
  }
  func.func @transform_10(%arg0: i32) -> (i32, i32) {
    %c0_i32 = arith.constant 0 : i32
    %c0_i32_0 = arith.constant 0 : i32
    %c0_i32_1 = arith.constant 0 : i32
    return %c0_i32, %c0_i32_0 : i32, i32
  }
  func.func @transform_11(%arg0: i32) -> (i32, i32) {
    %c0_i32 = arith.constant 0 : i32
    %c0_i32_0 = arith.constant 0 : i32
    %c0_i32_1 = arith.constant 0 : i32
    return %c0_i32, %c0_i32_0 : i32, i32
  }
  func.func @transform_12(%arg0: i32) -> (i32, i32) {
    %c0_i32 = arith.constant 0 : i32
    %c0_i32_0 = arith.constant 0 : i32
    %c0_i32_1 = arith.constant 0 : i32
    return %c0_i32, %c0_i32_0 : i32, i32
  }
  func.func @transform_13(%arg0: i32) -> (i32, i32) {
    %c0_i32 = arith.constant 0 : i32
    %c0_i32_0 = arith.constant 0 : i32
    %c0_i32_1 = arith.constant 0 : i32
    return %c0_i32, %c0_i32_0 : i32, i32
  }
  func.func @transform_14(%arg0: i32) -> (i32, i32, i32) {
    %c0_i32 = arith.constant 0 : i32
    %c0_i32_0 = arith.constant 0 : i32
    %c0_i32_1 = arith.constant 0 : i32
    return %arg0, %c0_i32, %c0_i32_0 : i32, i32, i32
  }
}

</mosaic_0001>

<llo_original>
// kernel: tpu_custom_call.1
$region0: #{tpu_custom_call.1}
  #allocation0 [shape = 'u32[]', space=smem, size = 0x4, offset = 0x4, fixed_abs, tag = 'smem constant byte address 0x4 - core index']
  #allocation1 [shape = 'u32[144,128]{1,0:T(1,128)}', space=vmem, size = 0x12000, scoped, tag = 'internal scratch']
  %s0 = inlined_call_operand.hbm [shape: f32[2,8,32], index: 0, kind: input, shape index: {}]
  %s1 = inlined_call_operand.hbm [shape: f32[2,1,8], index: 1, kind: input, shape index: {}]
  %s2 = inlined_call_operand.vmem [shape: f32[32,96], index: 2, kind: input, shape index: {}]
  %s3 = inlined_call_operand.vmem [shape: f32[1,96], index: 3, kind: input, shape index: {}]
  %s4 = inlined_call_operand.vmem [shape: f32[32,32], index: 4, kind: input, shape index: {}]
  %s5 = inlined_call_operand.vmem [shape: f32[1,32], index: 5, kind: input, shape index: {}]
  %s6 = inlined_call_operand.vmem [shape: f32[1,32], index: 6, kind: input, shape index: {}]
  %s7 = inlined_call_operand.vmem [shape: f32[1,32], index: 7, kind: input, shape index: {}]
  %s8 = inlined_call_operand.vmem [shape: f32[32,64], index: 8, kind: input, shape index: {}]
  %s9 = inlined_call_operand.vmem [shape: f32[1,64], index: 9, kind: input, shape index: {}]
  %s10 = inlined_call_operand.vmem [shape: f32[64,32], index: 10, kind: input, shape index: {}]
  %s11 = inlined_call_operand.vmem [shape: f32[1,32], index: 11, kind: input, shape index: {}]
  %s12 = inlined_call_operand.vmem [shape: f32[1,32], index: 12, kind: input, shape index: {}]
  %s13 = inlined_call_operand.vmem [shape: f32[1,32], index: 13, kind: input, shape index: {}]
  %s14 = inlined_call_operand.hbm [shape: f32[2,8,32], index: 14, kind: output, shape index: {}]
  %s15 = sld [smem:[#allocation0]]
  $region97: #{tpu_custom_call.1} parent=0
    _
  %s17 = ssub.s32 1, %s15
  %s18 = scalar_select 0, %s17, %s15
  $region1: #{tpu_custom_call.1} parent=0
    #allocation2 [shape = 'u8[8192]{0}', space=vmem, size = 0x2000, scoped, tag = 'input window, operand 0']
    #allocation3 [shape = 's32[2]{0}', space=sflag, size = 0x8, scoped, tag = 'scoped memory for tpu_custom_call.1']
    #allocation4 [shape = 's32[2]{0}', space=sflag, size = 0x8, scoped, tag = 'scoped memory for tpu_custom_call.1']
    #allocation5 [shape = 'u8[1024]{0}', space=vmem, size = 0x400, scoped, tag = 'input window, operand 1']
    #allocation6 [shape = 's32[2]{0}', space=sflag, size = 0x8, scoped, tag = 'scoped memory for tpu_custom_call.1']
    #allocation7 [shape = 'u8[8192]{0}', space=vmem, size = 0x2000, scoped, tag = 'output window, operand 0']
    %19 = vsyncpa [#allocation3], 0
    %s20 = scalar_lea.sflag [#allocation3], 1
    %21 = vsyncpa %s20, 0
    %22 = vsyncpa [#allocation6], 0
    %s23 = scalar_lea.sflag [#allocation6], 1
    %24 = vsyncpa %s23, 0
    %25 = vsyncpa [#allocation4], 0
    %s26 = scalar_lea.sflag [#allocation4], 1
    %27 = vsyncpa %s26, 0
    loop: start=0, step=1, limit=4
    $region2: #{tpu_custom_call.1} parent=1 // loop_pre_header
      _
    $region3: #{tpu_custom_call.1} parent=1 // loop_header
      %s29 = sphi 0, %s33
      %p30 = scmp.ge.s32.totalorder %s29, 4
      %s39 = sphi 0, %s41
      %s42 = sphi 0, %s39
      %s43 = sphi 0, %s42
      %s59 = sphi 0, %s43
      %s65 = sphi 0, %s67
      %s68 = sphi 0, %s65
      %s69 = sphi 0, %s68
      %s85 = sphi 0, %s69
      %s89 = sphi 0, %s89
      %s91 = sphi 0, %s89
      %s92 = sphi 0, %s91
      %s106 = sphi 0, %s92
      %s110 = sphi 0, %s110
      %s112 = sphi 0, %s110
      %s113 = sphi 0, %s112
      %s127 = sphi 0, %s113
      %s131 = sphi 0, %s131
      %s133 = sphi 0, %s131
      %s134 = sphi 0, %s133
      %s148 = sphi 0, %s134
      %s152 = sphi 0, %s152
      %s154 = sphi 0, %s152
      %s155 = sphi 0, %s154
      %s169 = sphi 0, %s155
      %s173 = sphi 0, %s173
      %s175 = sphi 0, %s173
      %s176 = sphi 0, %s175
      %s190 = sphi 0, %s176
      %s194 = sphi 0, %s194
      %s196 = sphi 0, %s194
      %s197 = sphi 0, %s196
      %s211 = sphi 0, %s197
      %s215 = sphi 0, %s215
      %s217 = sphi 0, %s215
      %s218 = sphi 0, %s217
      %s232 = sphi 0, %s218
      %s236 = sphi 0, %s236
      %s238 = sphi 0, %s236
      %s239 = sphi 0, %s238
      %s253 = sphi 0, %s239
      %s257 = sphi 0, %s257
      %s259 = sphi 0, %s257
      %s260 = sphi 0, %s259
      %s274 = sphi 0, %s260
      %s278 = sphi 0, %s278
      %s280 = sphi 0, %s278
      %s281 = sphi 0, %s280
      %s295 = sphi 0, %s281
      %s299 = sphi 0, %s299
      %s301 = sphi 0, %s299
      %s302 = sphi 0, %s301
      %s316 = sphi 0, %s302
      %s320 = sphi 0, %s320
      %s322 = sphi 0, %s320
      %s323 = sphi 0, %s322
      %s337 = sphi 0, %s323
      %s343 = sphi 0, %s345
      %s346 = sphi 0, %s343
      %s347 = sphi 0, %s346
      %s363 = sphi 0, %s347
    $region4: #{tpu_custom_call.1} parent=1 // loop_header_branch
      %32 = sbr.rel (%p30) target = $region8
    $region5: #{tpu_custom_call.1} parent=1 // loop_body
      %s34 = ssub.s32 %s29, 1
      %s35 = ssub.s32 %s29, 2
      %s36 = sadd.s32 %s29, 1
      %s37 = ssub.s32 %s29, %s36
      %p38 = scmp.eq.s32.totalorder %s37, 0
      %s40 = sadd.s32 %s39, 1
      %s41 = scalar_select %p38, %s39, %s40
      %p44 = pneg %p38
      %p45 = scmp.eq.s32.totalorder %s29, 1
      %p46 = por %p44, %p45
      %p47 = scmp.ne.s32.totalorder %s39, %s42
      %p48 = scmp.eq.s32.totalorder %s29, 0
      %p49 = por %p47, %p48
      %p50 = scmp.ne.s32.totalorder %s39, %s42
      %p51 = scmp.eq.s32.totalorder %s34, 1
      %p52 = por %p50, %p51
      %p53 = scmp.ne.s32.totalorder %s42, %s43
      %p54 = scmp.eq.s32.totalorder %s34, 0
      %p55 = por %p53, %p54
      %p56 = scmp.ne.s32.totalorder %s42, %s43
      %p57 = scmp.eq.s32.totalorder %s35, 1
      %p58 = por %p56, %p57
      %p60 = scmp.ne.s32.totalorder %s43, %s59
      %p61 = scmp.eq.s32.totalorder %s35, 0
      %p62 = por %p60, %p61
      %s63 = ssub.s32 %s29, %s36
      %p64 = scmp.eq.s32.totalorder %s63, 0
      %s66 = sadd.s32 %s65, 1
      %s67 = scalar_select %p64, %s65, %s66
      %p70 = pneg %p64
      %p71 = scmp.eq.s32.totalorder %s29, 1
      %p72 = por %p70, %p71
      %p73 = scmp.ne.s32.totalorder %s65, %s68
      %p74 = scmp.eq.s32.totalorder %s29, 0
      %p75 = por %p73, %p74
      %p76 = scmp.ne.s32.totalorder %s65, %s68
      %p77 = scmp.eq.s32.totalorder %s34, 1
      %p78 = por %p76, %p77
      %p79 = scmp.ne.s32.totalorder %s68, %s69
      %p80 = scmp.eq.s32.totalorder %s34, 0
      %p81 = por %p79, %p80
      %p82 = scmp.ne.s32.totalorder %s68, %s69
      %p83 = scmp.eq.s32.totalorder %s35, 1
      %p84 = por %p82, %p83
      %p86 = scmp.ne.s32.totalorder %s69, %s85
      %p87 = scmp.eq.s32.totalorder %s35, 0
      %p88 = por %p86, %p87
      %s90 = sadd.s32 %s89, 1
      %p93 = scmp.eq.s32.totalorder %s29, 1
      %p94 = scmp.ne.s32.totalorder %s89, %s91
      %p95 = scmp.eq.s32.totalorder %s29, 0
      %p96 = por %p94, %p95
      %p97 = scmp.ne.s32.totalorder %s89, %s91
      %p98 = scmp.eq.s32.totalorder %s34, 1
      %p99 = por %p97, %p98
      %p100 = scmp.ne.s32.totalorder %s91, %s92
      %p101 = scmp.eq.s32.totalorder %s34, 0
      %p102 = por %p100, %p101
      %p103 = scmp.ne.s32.totalorder %s91, %s92
      %p104 = scmp.eq.s32.totalorder %s35, 1
      %p105 = por %p103, %p104
      %p107 = scmp.ne.s32.totalorder %s92, %s106
      %p108 = scmp.eq.s32.totalorder %s35, 0
      %p109 = por %p107, %p108
      %s111 = sadd.s32 %s110, 1
      %p114 = scmp.eq.s32.totalorder %s29, 1
      %p115 = scmp.ne.s32.totalorder %s110, %s112
      %p116 = scmp.eq.s32.totalorder %s29, 0
      %p117 = por %p115, %p116
      %p118 = scmp.ne.s32.totalorder %s110, %s112
      %p119 = scmp.eq.s32.totalorder %s34, 1
      %p120 = por %p118, %p119
      %p121 = scmp.ne.s32.totalorder %s112, %s113
      %p122 = scmp.eq.s32.totalorder %s34, 0
      %p123 = por %p121, %p122
      %p124 = scmp.ne.s32.totalorder %s112, %s113
      %p125 = scmp.eq.s32.totalorder %s35, 1
      %p126 = por %p124, %p125
      %p128 = scmp.ne.s32.totalorder %s113, %s127
      %p129 = scmp.eq.s32.totalorder %s35, 0
      %p130 = por %p128, %p129
      %s132 = sadd.s32 %s131, 1
      %p135 = scmp.eq.s32.totalorder %s29, 1
      %p136 = scmp.ne.s32.totalorder %s131, %s133
      %p137 = scmp.eq.s32.totalorder %s29, 0
      %p138 = por %p136, %p137
      %p139 = scmp.ne.s32.totalorder %s131, %s133
      %p140 = scmp.eq.s32.totalorder %s34, 1
      %p141 = por %p139, %p140
      %p142 = scmp.ne.s32.totalorder %s133, %s134
      %p143 = scmp.eq.s32.totalorder %s34, 0
      %p144 = por %p142, %p143
      %p145 = scmp.ne.s32.totalorder %s133, %s134
      %p146 = scmp.eq.s32.totalorder %s35, 1
      %p147 = por %p145, %p146
      %p149 = scmp.ne.s32.totalorder %s134, %s148
      %p150 = scmp.eq.s32.totalorder %s35, 0
      %p151 = por %p149, %p150
      %s153 = sadd.s32 %s152, 1
      %p156 = scmp.eq.s32.totalorder %s29, 1
      %p157 = scmp.ne.s32.totalorder %s152, %s154
      %p158 = scmp.eq.s32.totalorder %s29, 0
      %p159 = por %p157, %p158
      %p160 = scmp.ne.s32.totalorder %s152, %s154
      %p161 = scmp.eq.s32.totalorder %s34, 1
      %p162 = por %p160, %p161
      %p163 = scmp.ne.s32.totalorder %s154, %s155
      %p164 = scmp.eq.s32.totalorder %s34, 0
      %p165 = por %p163, %p164
      %p166 = scmp.ne.s32.totalorder %s154, %s155
      %p167 = scmp.eq.s32.totalorder %s35, 1
      %p168 = por %p166, %p167
      %p170 = scmp.ne.s32.totalorder %s155, %s169
      %p171 = scmp.eq.s32.totalorder %s35, 0
      %p172 = por %p170, %p171
      %s174 = sadd.s32 %s173, 1
      %p177 = scmp.eq.s32.totalorder %s29, 1
      %p178 = scmp.ne.s32.totalorder %s173, %s175
      %p179 = scmp.eq.s32.totalorder %s29, 0
      %p180 = por %p178, %p179
      %p181 = scmp.ne.s32.totalorder %s173, %s175
      %p182 = scmp.eq.s32.totalorder %s34, 1
      %p183 = por %p181, %p182
      %p184 = scmp.ne.s32.totalorder %s175, %s176
      %p185 = scmp.eq.s32.totalorder %s34, 0
      %p186 = por %p184, %p185
      %p187 = scmp.ne.s32.totalorder %s175, %s176
      %p188 = scmp.eq.s32.totalorder %s35, 1
      %p189 = por %p187, %p188
      %p191 = scmp.ne.s32.totalorder %s176, %s190
      %p192 = scmp.eq.s32.totalorder %s35, 0
      %p193 = por %p191, %p192
      %s195 = sadd.s32 %s194, 1
      %p198 = scmp.eq.s32.totalorder %s29, 1
      %p199 = scmp.ne.s32.totalorder %s194, %s196
      %p200 = scmp.eq.s32.totalorder %s29, 0
      %p201 = por %p199, %p200
      %p202 = scmp.ne.s32.totalorder %s194, %s196
      %p203 = scmp.eq.s32.totalorder %s34, 1
      %p204 = por %p202, %p203
      %p205 = scmp.ne.s32.totalorder %s196, %s197
      %p206 = scmp.eq.s32.totalorder %s34, 0
      %p207 = por %p205, %p206
      %p208 = scmp.ne.s32.totalorder %s196, %s197
      %p209 = scmp.eq.s32.totalorder %s35, 1
      %p210 = por %p208, %p209
      %p212 = scmp.ne.s32.totalorder %s197, %s211
      %p213 = scmp.eq.s32.totalorder %s35, 0
      %p214 = por %p212, %p213
      %s216 = sadd.s32 %s215, 1
      %p219 = scmp.eq.s32.totalorder %s29, 1
      %p220 = scmp.ne.s32.totalorder %s215, %s217
      %p221 = scmp.eq.s32.totalorder %s29, 0
      %p222 = por %p220, %p221
      %p223 = scmp.ne.s32.totalorder %s215, %s217
      %p224 = scmp.eq.s32.totalorder %s34, 1
      %p225 = por %p223, %p224
      %p226 = scmp.ne.s32.totalorder %s217, %s218
      %p227 = scmp.eq.s32.totalorder %s34, 0
      %p228 = por %p226, %p227
      %p229 = scmp.ne.s32.totalorder %s217, %s218
      %p230 = scmp.eq.s32.totalorder %s35, 1
      %p231 = por %p229, %p230
      %p233 = scmp.ne.s32.totalorder %s218, %s232
      %p234 = scmp.eq.s32.totalorder %s35, 0
      %p235 = por %p233, %p234
      %s237 = sadd.s32 %s236, 1
      %p240 = scmp.eq.s32.totalorder %s29, 1
      %p241 = scmp.ne.s32.totalorder %s236, %s238
      %p242 = scmp.eq.s32.totalorder %s29, 0
      %p243 = por %p241, %p242
      %p244 = scmp.ne.s32.totalorder %s236, %s238
      %p245 = scmp.eq.s32.totalorder %s34, 1
      %p246 = por %p244, %p245
      %p247 = scmp.ne.s32.totalorder %s238, %s239
      %p248 = scmp.eq.s32.totalorder %s34, 0
      %p249 = por %p247, %p248
      %p250 = scmp.ne.s32.totalorder %s238, %s239
      %p251 = scmp.eq.s32.totalorder %s35, 1
      %p252 = por %p250, %p251
      %p254 = scmp.ne.s32.totalorder %s239, %s253
      %p255 = scmp.eq.s32.totalorder %s35, 0
      %p256 = por %p254, %p255
      %s258 = sadd.s32 %s257, 1
      %p261 = scmp.eq.s32.totalorder %s29, 1
      %p262 = scmp.ne.s32.totalorder %s257, %s259
      %p263 = scmp.eq.s32.totalorder %s29, 0
      %p264 = por %p262, %p263
      %p265 = scmp.ne.s32.totalorder %s257, %s259
      %p266 = scmp.eq.s32.totalorder %s34, 1
      %p267 = por %p265, %p266
      %p268 = scmp.ne.s32.totalorder %s259, %s260
      %p269 = scmp.eq.s32.totalorder %s34, 0
      %p270 = por %p268, %p269
      %p271 = scmp.ne.s32.totalorder %s259, %s260
      %p272 = scmp.eq.s32.totalorder %s35, 1
      %p273 = por %p271, %p272
      %p275 = scmp.ne.s32.totalorder %s260, %s274
      %p276 = scmp.eq.s32.totalorder %s35, 0
      %p277 = por %p275, %p276
      %s279 = sadd.s32 %s278, 1
      %p282 = scmp.eq.s32.totalorder %s29, 1
      %p283 = scmp.ne.s32.totalorder %s278, %s280
      %p284 = scmp.eq.s32.totalorder %s29, 0
      %p285 = por %p283, %p284
      %p286 = scmp.ne.s32.totalorder %s278, %s280
      %p287 = scmp.eq.s32.totalorder %s34, 1
      %p288 = por %p286, %p287
      %p289 = scmp.ne.s32.totalorder %s280, %s281
      %p290 = scmp.eq.s32.totalorder %s34, 0
      %p291 = por %p289, %p290
      %p292 = scmp.ne.s32.totalorder %s280, %s281
      %p293 = scmp.eq.s32.totalorder %s35, 1
      %p294 = por %p292, %p293
      %p296 = scmp.ne.s32.totalorder %s281, %s295
      %p297 = scmp.eq.s32.totalorder %s35, 0
      %p298 = por %p296, %p297
      %s300 = sadd.s32 %s299, 1
      %p303 = scmp.eq.s32.totalorder %s29, 1
      %p304 = scmp.ne.s32.totalorder %s299, %s301
      %p305 = scmp.eq.s32.totalorder %s29, 0
      %p306 = por %p304, %p305
      %p307 = scmp.ne.s32.totalorder %s299, %s301
      %p308 = scmp.eq.s32.totalorder %s34, 1
      %p309 = por %p307, %p308
      %p310 = scmp.ne.s32.totalorder %s301, %s302
      %p311 = scmp.eq.s32.totalorder %s34, 0
      %p312 = por %p310, %p311
      %p313 = scmp.ne.s32.totalorder %s301, %s302
      %p314 = scmp.eq.s32.totalorder %s35, 1
      %p315 = por %p313, %p314
      %p317 = scmp.ne.s32.totalorder %s302, %s316
      %p318 = scmp.eq.s32.totalorder %s35, 0
      %p319 = por %p317, %p318
      %s321 = sadd.s32 %s320, 1
      %p324 = scmp.eq.s32.totalorder %s29, 1
      %p325 = scmp.ne.s32.totalorder %s320, %s322
      %p326 = scmp.eq.s32.totalorder %s29, 0
      %p327 = por %p325, %p326
      %p328 = scmp.ne.s32.totalorder %s320, %s322
      %p329 = scmp.eq.s32.totalorder %s34, 1
      %p330 = por %p328, %p329
      %p331 = scmp.ne.s32.totalorder %s322, %s323
      %p332 = scmp.eq.s32.totalorder %s34, 0
      %p333 = por %p331, %p332
      %p334 = scmp.ne.s32.totalorder %s322, %s323
      %p335 = scmp.eq.s32.totalorder %s35, 1
      %p336 = por %p334, %p335
      %p338 = scmp.ne.s32.totalorder %s323, %s337
      %p339 = scmp.eq.s32.totalorder %s35, 0
      %p340 = por %p338, %p339
      %s341 = ssub.s32 %s29, %s36
      %p342 = scmp.eq.s32.totalorder %s341, 0
      %s344 = sadd.s32 %s343, 1
      %s345 = scalar_select %p342, %s343, %s344
      %p348 = pneg %p342
      %p349 = scmp.eq.s32.totalorder %s29, 1
      %p350 = por %p348, %p349
      %p351 = scmp.ne.s32.totalorder %s343, %s346
      %p352 = scmp.eq.s32.totalorder %s29, 0
      %p353 = por %p351, %p352
      %p354 = scmp.ne.s32.totalorder %s343, %s346
      %p355 = scmp.eq.s32.totalorder %s34, 1
      %p356 = por %p354, %p355
      %p357 = scmp.ne.s32.totalorder %s346, %s347
      %p358 = scmp.eq.s32.totalorder %s34, 0
      %p359 = por %p357, %p358
      %p360 = scmp.ne.s32.totalorder %s346, %s347
      %p361 = scmp.eq.s32.totalorder %s35, 1
      %p362 = por %p360, %p361
      %p364 = scmp.ne.s32.totalorder %s347, %s363
      %p365 = scmp.eq.s32.totalorder %s35, 0
      %p366 = por %p364, %p365
      %p367 = scmp.le.s32.totalorder 1, %s29
      %p368 = scmp.lt.s32.totalorder %s29, 3
      %p369 = pnand %p367, %p368
      %p370 = pneg %p369
      // Predicated region
      $region9: #{tpu_custom_call.1} parent=5 // pred_check
        _
      $region10: #{tpu_custom_call.1} parent=5 // pred_check_branch
        %372 = sbr.rel (%p369) target = $region12
      $region11: #{tpu_custom_call.1} parent=5 // pred_region
        %s373 = ssub.s32 %s29, 1
        // Predicated region
        $region13: #{tpu_custom_call.1} parent=11 // pred_check
          %p374 = pneg %p102
        $region14: #{tpu_custom_call.1} parent=11 // pred_check_branch
          %376 = sbr.rel (%p374) target = $region16
        $region15: #{tpu_custom_call.1} parent=11 // pred_region
          _
        $region16: #{tpu_custom_call.1} parent=11 // pred_fallthru
          _
        // Predicated region
        $region17: #{tpu_custom_call.1} parent=11 // pred_check
          %p377 = pneg %p123
        $region18: #{tpu_custom_call.1} parent=11 // pred_check_branch
          %379 = sbr.rel (%p377) target = $region20
        $region19: #{tpu_custom_call.1} parent=11 // pred_region
          _
        $region20: #{tpu_custom_call.1} parent=11 // pred_fallthru
          _
        // Predicated region
        $region21: #{tpu_custom_call.1} parent=11 // pred_check
          %p380 = pneg %p144
        $region22: #{tpu_custom_call.1} parent=11 // pred_check_branch
          %382 = sbr.rel (%p380) target = $region24
        $region23: #{tpu_custom_call.1} parent=11 // pred_region
          _
        $region24: #{tpu_custom_call.1} parent=11 // pred_fallthru
          _
        // Predicated region
        $region25: #{tpu_custom_call.1} parent=11 // pred_check
          %p383 = pneg %p165
        $region26: #{tpu_custom_call.1} parent=11 // pred_check_branch
          %385 = sbr.rel (%p383) target = $region28
        $region27: #{tpu_custom_call.1} parent=11 // pred_region
          _
        $region28: #{tpu_custom_call.1} parent=11 // pred_fallthru
          _
        // Predicated region
        $region29: #{tpu_custom_call.1} parent=11 // pred_check
          %p386 = pneg %p186
        $region30: #{tpu_custom_call.1} parent=11 // pred_check_branch
          %388 = sbr.rel (%p386) target = $region32
        $region31: #{tpu_custom_call.1} parent=11 // pred_region
          _
        $region32: #{tpu_custom_call.1} parent=11 // pred_fallthru
          _
        // Predicated region
        $region33: #{tpu_custom_call.1} parent=11 // pred_check
          %p389 = pneg %p207
        $region34: #{tpu_custom_call.1} parent=11 // pred_check_branch
          %391 = sbr.rel (%p389) target = $region36
        $region35: #{tpu_custom_call.1} parent=11 // pred_region
          _
        $region36: #{tpu_custom_call.1} parent=11 // pred_fallthru
          _
        // Predicated region
        $region37: #{tpu_custom_call.1} parent=11 // pred_check
          %p392 = pneg %p228
        $region38: #{tpu_custom_call.1} parent=11 // pred_check_branch
          %394 = sbr.rel (%p392) target = $region40
        $region39: #{tpu_custom_call.1} parent=11 // pred_region
          _
        $region40: #{tpu_custom_call.1} parent=11 // pred_fallthru
          _
        // Predicated region
        $region41: #{tpu_custom_call.1} parent=11 // pred_check
          %p395 = pneg %p249
        $region42: #{tpu_custom_call.1} parent=11 // pred_check_branch
          %397 = sbr.rel (%p395) target = $region44
        $region43: #{tpu_custom_call.1} parent=11 // pred_region
          _
        $region44: #{tpu_custom_call.1} parent=11 // pred_fallthru
          _
        // Predicated region
        $region45: #{tpu_custom_call.1} parent=11 // pred_check
          %p398 = pneg %p270
        $region46: #{tpu_custom_call.1} parent=11 // pred_check_branch
          %400 = sbr.rel (%p398) target = $region48
        $region47: #{tpu_custom_call.1} parent=11 // pred_region
          _
        $region48: #{tpu_custom_call.1} parent=11 // pred_fallthru
          _
        // Predicated region
        $region49: #{tpu_custom_call.1} parent=11 // pred_check
          %p401 = pneg %p291
        $region50: #{tpu_custom_call.1} parent=11 // pred_check_branch
          %403 = sbr.rel (%p401) target = $region52
        $region51: #{tpu_custom_call.1} parent=11 // pred_region
          _
        $region52: #{tpu_custom_call.1} parent=11 // pred_fallthru
          _
        // Predicated region
        $region53: #{tpu_custom_call.1} parent=11 // pred_check
          %p404 = pneg %p312
        $region54: #{tpu_custom_call.1} parent=11 // pred_check_branch
          %406 = sbr.rel (%p404) target = $region56
        $region55: #{tpu_custom_call.1} parent=11 // pred_region
          _
        $region56: #{tpu_custom_call.1} parent=11 // pred_fallthru
          _
        // Predicated region
        $region57: #{tpu_custom_call.1} parent=11 // pred_check
          %p407 = pneg %p333
        $region58: #{tpu_custom_call.1} parent=11 // pred_check_branch
          %409 = sbr.rel (%p407) target = $region60
        $region59: #{tpu_custom_call.1} parent=11 // pred_region
          _
        $region60: #{tpu_custom_call.1} parent=11 // pred_fallthru
          _
      $region12: #{tpu_custom_call.1} parent=5 // pred_fallthru
        _
      %p410 = scmp.lt.s32.totalorder %s29, 2
      // Predicated region
      $region61: #{tpu_custom_call.1} parent=5 // pred_check
        %p411 = pneg %p410
      $region62: #{tpu_custom_call.1} parent=5 // pred_check_branch
        %413 = sbr.rel (%p411) target = $region64
      $region63: #{tpu_custom_call.1} parent=5 // pred_region
        // Predicated region
        $region65: #{tpu_custom_call.1} parent=63 // pred_check
          %p414 = pneg %p49
        $region66: #{tpu_custom_call.1} parent=63 // pred_check_branch
          %416 = sbr.rel (%p414) target = $region68
        $region67: #{tpu_custom_call.1} parent=63 // pred_region
          %s417 = sand.u32 %s39, 1
          %s418 = scalar_lea.sflag [#allocation3], %s417
          %s419 = sand.u32 %s39, 1
          %s420 = smul.addr %s419, 8
          %s421 = scalar_lea.vmem [#allocation2], %s420
          %s423 = ssub.s32 128, 128
          %424 = vsyncadd %s418, %s423
          %s425 = smul.addr %s29, 128
          %s426 = scalar_lea.hbm %s0, %s425
          %s428 = sshll.u32 %s421, 4
          %s429 = int_to_ptr.vmem [resolvable:$true] %s428
          %431 = dma.hbm_to_vmem [thread:$0]  %s426, 128, %s429, %s418
        $region68: #{tpu_custom_call.1} parent=63 // pred_fallthru
          _
        // Predicated region
        $region69: #{tpu_custom_call.1} parent=63 // pred_check
          %p432 = pneg %p75
        $region70: #{tpu_custom_call.1} parent=63 // pred_check_branch
          %434 = sbr.rel (%p432) target = $region72
        $region71: #{tpu_custom_call.1} parent=63 // pred_region
          %s435 = sand.u32 %s65, 1
          %s436 = scalar_lea.sflag [#allocation6], %s435
          %s437 = sand.u32 %s65, 1
          %s438 = scalar_lea.vmem [#allocation5], %s437
          %s440 = ssub.s32 16, 16
          %441 = vsyncadd %s436, %s440
          %s442 = smul.addr %s29, 16
          %s443 = scalar_lea.hbm %s1, %s442
          %s445 = sshll.u32 %s438, 4
          %s446 = int_to_ptr.vmem [resolvable:$true] %s445
          %448 = dma.hbm_to_vmem [thread:$0]  %s443, 16, %s446, %s436
        $region72: #{tpu_custom_call.1} parent=63 // pred_fallthru
          _
      $region64: #{tpu_custom_call.1} parent=5 // pred_fallthru
        _
      %p449 = scmp.le.s32.totalorder 1, %s29
      %p450 = scmp.lt.s32.totalorder %s29, 3
      %p451 = pnand %p449, %p450
      %p452 = pneg %p451
      // Predicated region
      $region73: #{tpu_custom_call.1} parent=5 // pred_check
        _
      $region74: #{tpu_custom_call.1} parent=5 // pred_check_branch
        %454 = sbr.rel (%p451) target = $region76
      $region75: #{tpu_custom_call.1} parent=5 // pred_region
        %s455 = ssub.s32 %s29, 1
        %s456 = sand.u32 %s42, 1
        %s457 = scalar_lea.sflag [#allocation3], %s456
        %s458 = sand.u32 %s42, 1
        %s459 = smul.addr %s458, 8
        %s460 = scalar_lea.vmem [#allocation2], %s459
        // Predicated region
        $region77: #{tpu_custom_call.1} parent=75 // pred_check
          %p461 = pneg %p55
        $region78: #{tpu_custom_call.1} parent=75 // pred_check_branch
          %463 = sbr.rel (%p461) target = $region80
        $region79: #{tpu_custom_call.1} parent=75 // pred_region
          %464 = dma.done %s457, 128
        $region80: #{tpu_custom_call.1} parent=75 // pred_fallthru
          _
        %s465 = sand.u32 %s68, 1
        %s466 = scalar_lea.sflag [#allocation6], %s465
        %s467 = sand.u32 %s68, 1
        %s468 = scalar_lea.vmem [#allocation5], %s467
        // Predicated region
        $region81: #{tpu_custom_call.1} parent=75 // pred_check
          %p469 = pneg %p81
        $region82: #{tpu_custom_call.1} parent=75 // pred_check_branch
          %471 = sbr.rel (%p469) target = $region84
        $region83: #{tpu_custom_call.1} parent=75 // pred_region
          %472 = dma.done %s466, 16
        $region84: #{tpu_custom_call.1} parent=75 // pred_fallthru
          _
        %s473 = sand.u32 %s42, 1
        %s474 = scalar_lea.sflag [#allocation3], %s473
        %s475 = sand.u32 %s42, 1
        %s476 = smul.addr %s475, 8
        %s477 = scalar_lea.vmem [#allocation2], %s476
        %p478 = pneg %p55
        %p479 = pneg %p52
        %s480 = sand.u32 %s68, 1
        %s481 = scalar_lea.sflag [#allocation6], %s480
        %s482 = sand.u32 %s68, 1
        %s483 = scalar_lea.vmem [#allocation5], %s482
        %p484 = pneg %p81
        %p485 = pneg %p78
        %p486 = pneg %p102
        %p487 = pneg %p99
        %p488 = pneg %p123
        %p489 = pneg %p120
        %p490 = pneg %p144
        %p491 = pneg %p141
        %p492 = pneg %p165
        %p493 = pneg %p162
        %p494 = pneg %p186
        %p495 = pneg %p183
        %p496 = pneg %p207
        %p497 = pneg %p204
        %p498 = pneg %p228
        %p499 = pneg %p225
        %p500 = pneg %p249
        %p501 = pneg %p246
        %p502 = pneg %p270
        %p503 = pneg %p267
        %p504 = pneg %p291
        %p505 = pneg %p288
        %p506 = pneg %p312
        %p507 = pneg %p309
        %p508 = pneg %p333
        %p509 = pneg %p330
        %p510 = pneg %p359
        %p511 = pneg %p356
        %s512 = sand.u32 %s346, 1
        %s513 = scalar_lea.sflag [#allocation4], %s512
        %s514 = sand.u32 %s346, 1
        %s515 = smul.addr %s514, 8
        %s516 = scalar_lea.vmem [#allocation7], %s515
        %v517 = vld [vmem:[%s460] sm:$0xff]
        %v518 = vld [vmem:[%s2] sm:$0xff]
        %v519 = vld [vmem:[%s2 + $0x8] sm:$0xff]
        %v520 = vld [vmem:[%s2 + $0x10] sm:$0xff]
        %v521 = vld [vmem:[%s2 + $0x18] sm:$0xff]
        %v522 = vld [vmem:[%s3] sm:$0x1]
        %v524 = vlaneseq
        %v525 = vshrl.u32 %v524, 7
        %v526 = vsub.s32 0, %v525
        %v527 = vrot.slane %v522, %v526
        %vm529 = vcmask 261120
        %v531 = vsel %vm529, %v517, 0
        %533 = vmatprep.subr.mxu0 0.0
        %534 = vmatpush1.msra.mxu0 0.0
        %535 = vmatprep.subr.mxu0 0.0
        %536 = vmatpush1.msra.mxu0 0.0
        %537 = vmatprep.subr.mxu0 0.0
        %538 = vmatpush1.msra.mxu0 0.0
        %539 = vmatprep.subr.mxu0 0.0
        %540 = vmatpush1.msra.mxu0 0.0
        %541 = vmatprep.subr.mxu0 0.0
        %542 = vmatpush1.msra.mxu0 0.0
        %543 = vmatprep.subr.mxu0 0.0
        %544 = vmatpush1.msra.mxu0 0.0
        %545 = vmatprep.subr.mxu0 0.0
        %546 = vmatpush1.msra.mxu0 0.0
        %547 = vmatprep.subr.mxu0 0.0
        %548 = vmatpush1.msra.mxu0 0.0
        %549 = vmatprep.subr.mxu0 0.0
        %550 = vmatpush1.msra.mxu0 0.0
        %551 = vmatprep.subr.mxu0 0.0
        %552 = vmatpush1.msra.mxu0 0.0
        %553 = vmatprep.subr.mxu0 0.0
        %554 = vmatpush1.msra.mxu0 0.0
        %555 = vmatprep.subr.mxu0 0.0
        %556 = vmatpush1.msra.mxu0 0.0
        %557 = vmatprep.subr.mxu0 0.0
        %558 = vmatpush1.msra.mxu0 %v521
        %559 = vmatprep.subr.mxu0 0.0
        %560 = vmatpush1.msra.mxu0 %v520
        %561 = vmatprep.subr.mxu0 0.0
        %562 = vmatpush1.msra.mxu0 %v519
        %563 = vmatprep.subr.mxu0 0.0
        %564 = vmatpush1.msra.mxu0 %v518
        %565 = vmatprep.subr.mxu0 0.0
        %566 = vmatpush2.msra.mxu0 0.0
        %567 = vmatprep.subr.mxu0 0.0
        %568 = vmatpush2.msra.mxu0 0.0
        %569 = vmatprep.subr.mxu0 0.0
        %570 = vmatpush2.msra.mxu0 0.0
        %571 = vmatprep.subr.mxu0 0.0
        %572 = vmatpush2.msra.mxu0 0.0
        %573 = vmatprep.subr.mxu0 0.0
        %574 = vmatpush2.msra.mxu0 0.0
        %575 = vmatprep.subr.mxu0 0.0
        %576 = vmatpush2.msra.mxu0 0.0
        %577 = vmatprep.subr.mxu0 0.0
        %578 = vmatpush2.msra.mxu0 0.0
        %579 = vmatprep.subr.mxu0 0.0
        %580 = vmatpush2.msra.mxu0 0.0
        %581 = vmatprep.subr.mxu0 0.0
        %582 = vmatpush2.msra.mxu0 0.0
        %583 = vmatprep.subr.mxu0 0.0
        %584 = vmatpush2.msra.mxu0 0.0
        %585 = vmatprep.subr.mxu0 0.0
        %586 = vmatpush2.msra.mxu0 0.0
        %587 = vmatprep.subr.mxu0 0.0
        %588 = vmatpush2.msra.mxu0 0.0
        %589 = vmatprep.subr.mxu0 0.0
        %590 = vmatpush2.msra.mxu0 0.0
        %591 = vmatprep.subr.mxu0 0.0
        %592 = vmatpush2.msra.mxu0 0.0
        %593 = vmatprep.subr.mxu0 0.0
        %594 = vmatpush2.msra.mxu0 0.0
        %595 = vmatprep.subr.mxu0 0.0
        %596 = vmatpush2.msra.mxu0 0.0
        %597 = vmatprep.mubr.f32.mxu0 0.0
        %598 = vmatmul.mubr.f32.gmra.mxu0 %v531
        %v599 = vpop.f32.mrf.mxu0
        %v600 = vadd.f32 %v527, %v599
        %v601 = vpop.f32.mrf.mxu0
        %602 = vdwg.mxu0
        %v603 = vld [vmem:[%s468] sm:$0x1]
        %v605 = vlaneseq
        %v606 = vshrl.u32 %v605, 7
        %v607 = vsub.s32 0, %v606
        %v608 = vrot.slane %v603, %v607
        %611 = vrot.lane.b32.xlu0 %v600, 96
        %v612 = vpop.permute.xlu0 %611
        %vm613 = vcmask 64512
        %v614 = vsel %vm613, %v600, 0
        %v616 = vsel %vm613, %v612, 0
        %618 = vmatprep.subr.mxu0 0.0
        %619 = vmatpush1.xpose.msra.mxu0 0.0
        %620 = vmatprep.subr.mxu0 0.0
        %621 = vmatpush1.xpose.msra.mxu0 0.0
        %622 = vmatprep.subr.mxu0 0.0
        %623 = vmatpush1.xpose.msra.mxu0 0.0
        %624 = vmatprep.subr.mxu0 0.0
        %625 = vmatpush1.xpose.msra.mxu0 0.0
        %626 = vmatprep.subr.mxu0 0.0
        %627 = vmatpush1.xpose.msra.mxu0 0.0
        %628 = vmatprep.subr.mxu0 0.0
        %629 = vmatpush1.xpose.msra.mxu0 0.0
        %630 = vmatprep.subr.mxu0 0.0
        %631 = vmatpush1.xpose.msra.mxu0 0.0
        %632 = vmatprep.subr.mxu0 0.0
        %633 = vmatpush1.xpose.msra.mxu0 0.0
        %634 = vmatprep.subr.mxu0 0.0
        %635 = vmatpush1.xpose.msra.mxu0 0.0
        %636 = vmatprep.subr.mxu0 0.0
        %637 = vmatpush1.xpose.msra.mxu0 0.0
        %638 = vmatprep.subr.mxu0 0.0
        %639 = vmatpush1.xpose.msra.mxu0 0.0
        %640 = vmatprep.subr.mxu0 0.0
        %641 = vmatpush1.xpose.msra.mxu0 0.0
        %642 = vmatprep.subr.mxu0 0.0
        %643 = vmatpush1.xpose.msra.mxu0 0.0
        %644 = vmatprep.subr.mxu0 0.0
        %645 = vmatpush1.xpose.msra.mxu0 0.0
        %646 = vmatprep.subr.mxu0 0.0
        %647 = vmatpush1.xpose.msra.mxu0 0.0
        %648 = vmatprep.subr.mxu0 0.0
        %649 = vmatpush1.xpose.msra.mxu0 %v616
        %650 = vmatprep.subr.mxu0 0.0
        %651 = vmatpush2.xpose.msra.mxu0 0.0
        %652 = vmatprep.subr.mxu0 0.0
        %653 = vmatpush2.xpose.msra.mxu0 0.0
        %654 = vmatprep.subr.mxu0 0.0
        %655 = vmatpush2.xpose.msra.mxu0 0.0
        %656 = vmatprep.subr.mxu0 0.0
        %657 = vmatpush2.xpose.msra.mxu0 0.0
        %658 = vmatprep.subr.mxu0 0.0
        %659 = vmatpush2.xpose.msra.mxu0 0.0
        %660 = vmatprep.subr.mxu0 0.0
        %661 = vmatpush2.xpose.msra.mxu0 0.0
        %662 = vmatprep.subr.mxu0 0.0
        %663 = vmatpush2.xpose.msra.mxu0 0.0
        %664 = vmatprep.subr.mxu0 0.0
        %665 = vmatpush2.xpose.msra.mxu0 0.0
        %666 = vmatprep.subr.mxu0 0.0
        %667 = vmatpush2.xpose.msra.mxu0 0.0
        %668 = vmatprep.subr.mxu0 0.0
        %669 = vmatpush2.xpose.msra.mxu0 0.0
        %670 = vmatprep.subr.mxu0 0.0
        %671 = vmatpush2.xpose.msra.mxu0 0.0
        %672 = vmatprep.subr.mxu0 0.0
        %673 = vmatpush2.xpose.msra.mxu0 0.0
        %674 = vmatprep.subr.mxu0 0.0
        %675 = vmatpush2.xpose.msra.mxu0 0.0
        %676 = vmatprep.subr.mxu0 0.0
        %677 = vmatpush2.xpose.msra.mxu0 0.0
        %678 = vmatprep.subr.mxu0 0.0
        %679 = vmatpush2.xpose.msra.mxu0 0.0
        %680 = vmatprep.subr.mxu0 0.0
        %681 = vmatpush2.xpose.msra.mxu0 0.0
        %682 = vmatprep.mubr.f32.mxu0 0.0
        %683 = vmatmul.mubr.f32.gmra.mxu0 %v614
        %v684 = vpop.f32.mrf.mxu0
        %v685 = vadd.f32 %v608, %v684
        %v686 = vpop.f32.mrf.mxu0
        %687 = vdwg.mxu0
        %v688 = vsel %vm613, %v685, -inf
        %689 = vmax.xlane.f32.xlu0 %v688
        %v690 = vpop.xlane.xlu0 %689
        %v691 = vsub.f32 %v685, %v690
        %v692 = vmul.f32 %v691, 1.442695
        %v693 = vpow.pop %v692
        %v694 = vsel %vm613, %v693, 0.0
        %695 = vadd.xlane.f32.xlu0 %v694
        %v696 = vpop.xlane.xlu0 %695
        %v697 = vrcp.pop %v696
        %v698 = vmul.f32 %v693, %v697
        %699 = vrot.lane.b32.xlu0 %v600, 64
        %v700 = vpop.permute.xlu0 %699
        %v703 = vsel %vm613, %v698, 0
        %705 = vmatprep.subr.mxu0 0.0
        %706 = vmatpush1.msra.mxu0 0.0
        %707 = vmatprep.subr.mxu0 0.0
        %708 = vmatpush1.msra.mxu0 0.0
        %709 = vmatprep.subr.mxu0 0.0
        %710 = vmatpush1.msra.mxu0 0.0
        %711 = vmatprep.subr.mxu0 0.0
        %712 = vmatpush1.msra.mxu0 0.0
        %713 = vmatprep.subr.mxu0 0.0
        %714 = vmatpush1.msra.mxu0 0.0
        %715 = vmatprep.subr.mxu0 0.0
        %716 = vmatpush1.msra.mxu0 0.0
        %717 = vmatprep.subr.mxu0 0.0
        %718 = vmatpush1.msra.mxu0 0.0
        %719 = vmatprep.subr.mxu0 0.0
        %720 = vmatpush1.msra.mxu0 0.0
        %721 = vmatprep.subr.mxu0 0.0
        %722 = vmatpush1.msra.mxu0 0.0
        %723 = vmatprep.subr.mxu0 0.0
        %724 = vmatpush1.msra.mxu0 0.0
        %725 = vmatprep.subr.mxu0 0.0
        %726 = vmatpush1.msra.mxu0 0.0
        %727 = vmatprep.subr.mxu0 0.0
        %728 = vmatpush1.msra.mxu0 0.0
        %729 = vmatprep.subr.mxu0 0.0
        %730 = vmatpush1.msra.mxu0 0.0
        %731 = vmatprep.subr.mxu0 0.0
        %732 = vmatpush1.msra.mxu0 0.0
        %733 = vmatprep.subr.mxu0 0.0
        %734 = vmatpush1.msra.mxu0 0.0
        %735 = vmatprep.subr.mxu0 0.0
        %736 = vmatpush1.msra.mxu0 %v700
        %737 = vmatprep.subr.mxu0 0.0
        %738 = vmatpush2.msra.mxu0 0.0
        %739 = vmatprep.subr.mxu0 0.0
        %740 = vmatpush2.msra.mxu0 0.0
        %741 = vmatprep.subr.mxu0 0.0
        %742 = vmatpush2.msra.mxu0 0.0
        %743 = vmatprep.subr.mxu0 0.0
        %744 = vmatpush2.msra.mxu0 0.0
        %745 = vmatprep.subr.mxu0 0.0
        %746 = vmatpush2.msra.mxu0 0.0
        %747 = vmatprep.subr.mxu0 0.0
        %748 = vmatpush2.msra.mxu0 0.0
        %749 = vmatprep.subr.mxu0 0.0
        %750 = vmatpush2.msra.mxu0 0.0
        %751 = vmatprep.subr.mxu0 0.0
        %752 = vmatpush2.msra.mxu0 0.0
        %753 = vmatprep.subr.mxu0 0.0
        %754 = vmatpush2.msra.mxu0 0.0
        %755 = vmatprep.subr.mxu0 0.0
        %756 = vmatpush2.msra.mxu0 0.0
        %757 = vmatprep.subr.mxu0 0.0
        %758 = vmatpush2.msra.mxu0 0.0
        %759 = vmatprep.subr.mxu0 0.0
        %760 = vmatpush2.msra.mxu0 0.0
        %761 = vmatprep.subr.mxu0 0.0
        %762 = vmatpush2.msra.mxu0 0.0
        %763 = vmatprep.subr.mxu0 0.0
        %764 = vmatpush2.msra.mxu0 0.0
        %765 = vmatprep.subr.mxu0 0.0
        %766 = vmatpush2.msra.mxu0 0.0
        %767 = vmatprep.subr.mxu0 0.0
        %768 = vmatpush2.msra.mxu0 0.0
        %769 = vmatprep.mubr.f32.mxu0 0.0
        %770 = vmatmul.mubr.f32.gmra.mxu0 %v703
        %v771 = vpop.f32.mrf.mxu0
        %v772 = vadd.f32 0.0, %v771
        %v773 = vpop.f32.mrf.mxu0
        %774 = vdwg.mxu0
        %775 = vrot.lane.b32.xlu0 %v600, 120
        %v776 = vpop.permute.xlu0 %775
        %777 = vrot.lane.b32.xlu0 %v600, 88
        %v778 = vpop.permute.xlu0 %777
        %v779 = vsel %vm613, %v776, 0
        %v781 = vsel %vm613, %v778, 0
        %783 = vmatprep.subr.mxu0 0.0
        %784 = vmatpush1.xpose.msra.mxu0 0.0
        %785 = vmatprep.subr.mxu0 0.0
        %786 = vmatpush1.xpose.msra.mxu0 0.0
        %787 = vmatprep.subr.mxu0 0.0
        %788 = vmatpush1.xpose.msra.mxu0 0.0
        %789 = vmatprep.subr.mxu0 0.0
        %790 = vmatpush1.xpose.msra.mxu0 0.0
        %791 = vmatprep.subr.mxu0 0.0
        %792 = vmatpush1.xpose.msra.mxu0 0.0
        %793 = vmatprep.subr.mxu0 0.0
        %794 = vmatpush1.xpose.msra.mxu0 0.0
        %795 = vmatprep.subr.mxu0 0.0
        %796 = vmatpush1.xpose.msra.mxu0 0.0
        %797 = vmatprep.subr.mxu0 0.0
        %798 = vmatpush1.xpose.msra.mxu0 0.0
        %799 = vmatprep.subr.mxu0 0.0
        %800 = vmatpush1.xpose.msra.mxu0 0.0
        %801 = vmatprep.subr.mxu0 0.0
        %802 = vmatpush1.xpose.msra.mxu0 0.0
        %803 = vmatprep.subr.mxu0 0.0
        %804 = vmatpush1.xpose.msra.mxu0 0.0
        %805 = vmatprep.subr.mxu0 0.0
        %806 = vmatpush1.xpose.msra.mxu0 0.0
        %807 = vmatprep.subr.mxu0 0.0
        %808 = vmatpush1.xpose.msra.mxu0 0.0
        %809 = vmatprep.subr.mxu0 0.0
        %810 = vmatpush1.xpose.msra.mxu0 0.0
        %811 = vmatprep.subr.mxu0 0.0
        %812 = vmatpush1.xpose.msra.mxu0 0.0
        %813 = vmatprep.subr.mxu0 0.0
        %814 = vmatpush1.xpose.msra.mxu0 %v781
        %815 = vmatprep.subr.mxu0 0.0
        %816 = vmatpush2.xpose.msra.mxu0 0.0
        %817 = vmatprep.subr.mxu0 0.0
        %818 = vmatpush2.xpose.msra.mxu0 0.0
        %819 = vmatprep.subr.mxu0 0.0
        %820 = vmatpush2.xpose.msra.mxu0 0.0
        %821 = vmatprep.subr.mxu0 0.0
        %822 = vmatpush2.xpose.msra.mxu0 0.0
        %823 = vmatprep.subr.mxu0 0.0
        %824 = vmatpush2.xpose.msra.mxu0 0.0
        %825 = vmatprep.subr.mxu0 0.0
        %826 = vmatpush2.xpose.msra.mxu0 0.0
        %827 = vmatprep.subr.mxu0 0.0
        %828 = vmatpush2.xpose.msra.mxu0 0.0
        %829 = vmatprep.subr.mxu0 0.0
        %830 = vmatpush2.xpose.msra.mxu0 0.0
        %831 = vmatprep.subr.mxu0 0.0
        %832 = vmatpush2.xpose.msra.mxu0 0.0
        %833 = vmatprep.subr.mxu0 0.0
        %834 = vmatpush2.xpose.msra.mxu0 0.0
        %835 = vmatprep.subr.mxu0 0.0
        %836 = vmatpush2.xpose.msra.mxu0 0.0
        %837 = vmatprep.subr.mxu0 0.0
        %838 = vmatpush2.xpose.msra.mxu0 0.0
        %839 = vmatprep.subr.mxu0 0.0
        %840 = vmatpush2.xpose.msra.mxu0 0.0
        %841 = vmatprep.subr.mxu0 0.0
        %842 = vmatpush2.xpose.msra.mxu0 0.0
        %843 = vmatprep.subr.mxu0 0.0
        %844 = vmatpush2.xpose.msra.mxu0 0.0
        %845 = vmatprep.subr.mxu0 0.0
        %846 = vmatpush2.xpose.msra.mxu0 0.0
        %847 = vmatprep.mubr.f32.mxu0 0.0
        %848 = vmatmul.mubr.f32.gmra.mxu0 %v779
        %v849 = vpop.f32.mrf.mxu0
        %v850 = vadd.f32 %v608, %v849
        %v851 = vpop.f32.mrf.mxu0
        %852 = vdwg.mxu0
        %v853 = vsel %vm613, %v850, -inf
        %854 = vmax.xlane.f32.xlu0 %v853
        %v855 = vpop.xlane.xlu0 %854
        %v856 = vsub.f32 %v850, %v855
        %v857 = vmul.f32 %v856, 1.442695
        %v858 = vpow.pop %v857
        %v859 = vsel %vm613, %v858, 0.0
        %860 = vadd.xlane.f32.xlu0 %v859
        %v861 = vpop.xlane.xlu0 %860
        %v862 = vrcp.pop %v861
        %v863 = vmul.f32 %v858, %v862
        %864 = vrot.lane.b32.xlu0 %v600, 56
        %v865 = vpop.permute.xlu0 %864
        %v868 = vsel %vm613, %v863, 0
        %870 = vmatprep.subr.mxu0 0.0
        %871 = vmatpush1.msra.mxu0 0.0
        %872 = vmatprep.subr.mxu0 0.0
        %873 = vmatpush1.msra.mxu0 0.0
        %874 = vmatprep.subr.mxu0 0.0
        %875 = vmatpush1.msra.mxu0 0.0
        %876 = vmatprep.subr.mxu0 0.0
        %877 = vmatpush1.msra.mxu0 0.0
        %878 = vmatprep.subr.mxu0 0.0
        %879 = vmatpush1.msra.mxu0 0.0
        %880 = vmatprep.subr.mxu0 0.0
        %881 = vmatpush1.msra.mxu0 0.0
        %882 = vmatprep.subr.mxu0 0.0
        %883 = vmatpush1.msra.mxu0 0.0
        %884 = vmatprep.subr.mxu0 0.0
        %885 = vmatpush1.msra.mxu0 0.0
        %886 = vmatprep.subr.mxu0 0.0
        %887 = vmatpush1.msra.mxu0 0.0
        %888 = vmatprep.subr.mxu0 0.0
        %889 = vmatpush1.msra.mxu0 0.0
        %890 = vmatprep.subr.mxu0 0.0
        %891 = vmatpush1.msra.mxu0 0.0
        %892 = vmatprep.subr.mxu0 0.0
        %893 = vmatpush1.msra.mxu0 0.0
        %894 = vmatprep.subr.mxu0 0.0
        %895 = vmatpush1.msra.mxu0 0.0
        %896 = vmatprep.subr.mxu0 0.0
        %897 = vmatpush1.msra.mxu0 0.0
        %898 = vmatprep.subr.mxu0 0.0
        %899 = vmatpush1.msra.mxu0 0.0
        %900 = vmatprep.subr.mxu0 0.0
        %901 = vmatpush1.msra.mxu0 %v865
        %902 = vmatprep.subr.mxu0 0.0
        %903 = vmatpush2.msra.mxu0 0.0
        %904 = vmatprep.subr.mxu0 0.0
        %905 = vmatpush2.msra.mxu0 0.0
        %906 = vmatprep.subr.mxu0 0.0
        %907 = vmatpush2.msra.mxu0 0.0
        %908 = vmatprep.subr.mxu0 0.0
        %909 = vmatpush2.msra.mxu0 0.0
        %910 = vmatprep.subr.mxu0 0.0
        %911 = vmatpush2.msra.mxu0 0.0
        %912 = vmatprep.subr.mxu0 0.0
        %913 = vmatpush2.msra.mxu0 0.0
        %914 = vmatprep.subr.mxu0 0.0
        %915 = vmatpush2.msra.mxu0 0.0
        %916 = vmatprep.subr.mxu0 0.0
        %917 = vmatpush2.msra.mxu0 0.0
        %918 = vmatprep.subr.mxu0 0.0
        %919 = vmatpush2.msra.mxu0 0.0
        %920 = vmatprep.subr.mxu0 0.0
        %921 = vmatpush2.msra.mxu0 0.0
        %922 = vmatprep.subr.mxu0 0.0
        %923 = vmatpush2.msra.mxu0 0.0
        %924 = vmatprep.subr.mxu0 0.0
        %925 = vmatpush2.msra.mxu0 0.0
        %926 = vmatprep.subr.mxu0 0.0
        %927 = vmatpush2.msra.mxu0 0.0
        %928 = vmatprep.subr.mxu0 0.0
        %929 = vmatpush2.msra.mxu0 0.0
        %930 = vmatprep.subr.mxu0 0.0
        %931 = vmatpush2.msra.mxu0 0.0
        %932 = vmatprep.subr.mxu0 0.0
        %933 = vmatpush2.msra.mxu0 0.0
        %934 = vmatprep.mubr.f32.mxu0 0.0
        %935 = vmatmul.mubr.f32.gmra.mxu0 %v868
        %v936 = vpop.f32.mrf.mxu0
        %v937 = vadd.f32 0.0, %v936
        %v938 = vpop.f32.mrf.mxu0
        %939 = vdwg.mxu0
        %940 = vrot.lane.b32.xlu0 %v600, 112
        %v941 = vpop.permute.xlu0 %940
        %942 = vrot.lane.b32.xlu0 %v600, 80
        %v943 = vpop.permute.xlu0 %942
        %v944 = vsel %vm613, %v941, 0
        %v946 = vsel %vm613, %v943, 0
        %948 = vmatprep.subr.mxu0 0.0
        %949 = vmatpush1.xpose.msra.mxu0 0.0
        %950 = vmatprep.subr.mxu0 0.0
        %951 = vmatpush1.xpose.msra.mxu0 0.0
        %952 = vmatprep.subr.mxu0 0.0
        %953 = vmatpush1.xpose.msra.mxu0 0.0
        %954 = vmatprep.subr.mxu0 0.0
        %955 = vmatpush1.xpose.msra.mxu0 0.0
        %956 = vmatprep.subr.mxu0 0.0
        %957 = vmatpush1.xpose.msra.mxu0 0.0
        %958 = vmatprep.subr.mxu0 0.0
        %959 = vmatpush1.xpose.msra.mxu0 0.0
        %960 = vmatprep.subr.mxu0 0.0
        %961 = vmatpush1.xpose.msra.mxu0 0.0
        %962 = vmatprep.subr.mxu0 0.0
        %963 = vmatpush1.xpose.msra.mxu0 0.0
        %964 = vmatprep.subr.mxu0 0.0
        %965 = vmatpush1.xpose.msra.mxu0 0.0
        %966 = vmatprep.subr.mxu0 0.0
        %967 = vmatpush1.xpose.msra.mxu0 0.0
        %968 = vmatprep.subr.mxu0 0.0
        %969 = vmatpush1.xpose.msra.mxu0 0.0
        %970 = vmatprep.subr.mxu0 0.0
        %971 = vmatpush1.xpose.msra.mxu0 0.0
        %972 = vmatprep.subr.mxu0 0.0
        %973 = vmatpush1.xpose.msra.mxu0 0.0
        %974 = vmatprep.subr.mxu0 0.0
        %975 = vmatpush1.xpose.msra.mxu0 0.0
        %976 = vmatprep.subr.mxu0 0.0
        %977 = vmatpush1.xpose.msra.mxu0 0.0
        %978 = vmatprep.subr.mxu0 0.0
        %979 = vmatpush1.xpose.msra.mxu0 %v946
        %980 = vmatprep.subr.mxu0 0.0
        %981 = vmatpush2.xpose.msra.mxu0 0.0
        %982 = vmatprep.subr.mxu0 0.0
        %983 = vmatpush2.xpose.msra.mxu0 0.0
        %984 = vmatprep.subr.mxu0 0.0
        %985 = vmatpush2.xpose.msra.mxu0 0.0
        %986 = vmatprep.subr.mxu0 0.0
        %987 = vmatpush2.xpose.msra.mxu0 0.0
        %988 = vmatprep.subr.mxu0 0.0
        %989 = vmatpush2.xpose.msra.mxu0 0.0
        %990 = vmatprep.subr.mxu0 0.0
        %991 = vmatpush2.xpose.msra.mxu0 0.0
        %992 = vmatprep.subr.mxu0 0.0
        %993 = vmatpush2.xpose.msra.mxu0 0.0
        %994 = vmatprep.subr.mxu0 0.0
        %995 = vmatpush2.xpose.msra.mxu0 0.0
        %996 = vmatprep.subr.mxu0 0.0
        %997 = vmatpush2.xpose.msra.mxu0 0.0
        %998 = vmatprep.subr.mxu0 0.0
        %999 = vmatpush2.xpose.msra.mxu0 0.0
        %1000 = vmatprep.subr.mxu0 0.0
        %1001 = vmatpush2.xpose.msra.mxu0 0.0
        %1002 = vmatprep.subr.mxu0 0.0
        %1003 = vmatpush2.xpose.msra.mxu0 0.0
        %1004 = vmatprep.subr.mxu0 0.0
        %1005 = vmatpush2.xpose.msra.mxu0 0.0
        %1006 = vmatprep.subr.mxu0 0.0
        %1007 = vmatpush2.xpose.msra.mxu0 0.0
        %1008 = vmatprep.subr.mxu0 0.0
        %1009 = vmatpush2.xpose.msra.mxu0 0.0
        %1010 = vmatprep.subr.mxu0 0.0
        %1011 = vmatpush2.xpose.msra.mxu0 0.0
        %1012 = vmatprep.mubr.f32.mxu0 0.0
        %1013 = vmatmul.mubr.f32.gmra.mxu0 %v944
        %v1014 = vpop.f32.mrf.mxu0
        %v1015 = vadd.f32 %v608, %v1014
        %v1016 = vpop.f32.mrf.mxu0
        %1017 = vdwg.mxu0
        %v1018 = vsel %vm613, %v1015, -inf
        %1019 = vmax.xlane.f32.xlu0 %v1018
        %v1020 = vpop.xlane.xlu0 %1019
        %v1021 = vsub.f32 %v1015, %v1020
        %v1022 = vmul.f32 %v1021, 1.442695
        %v1023 = vpow.pop %v1022
        %v1024 = vsel %vm613, %v1023, 0.0
        %1025 = vadd.xlane.f32.xlu0 %v1024
        %v1026 = vpop.xlane.xlu0 %1025
        %v1027 = vrcp.pop %v1026
        %v1028 = vmul.f32 %v1023, %v1027
        %1029 = vrot.lane.b32.xlu0 %v600, 48
        %v1030 = vpop.permute.xlu0 %1029
        %v1033 = vsel %vm613, %v1028, 0
        %1035 = vmatprep.subr.mxu0 0.0
        %1036 = vmatpush1.msra.mxu0 0.0
        %1037 = vmatprep.subr.mxu0 0.0
        %1038 = vmatpush1.msra.mxu0 0.0
        %1039 = vmatprep.subr.mxu0 0.0
        %1040 = vmatpush1.msra.mxu0 0.0
        %1041 = vmatprep.subr.mxu0 0.0
        %1042 = vmatpush1.msra.mxu0 0.0
        %1043 = vmatprep.subr.mxu0 0.0
        %1044 = vmatpush1.msra.mxu0 0.0
        %1045 = vmatprep.subr.mxu0 0.0
        %1046 = vmatpush1.msra.mxu0 0.0
        %1047 = vmatprep.subr.mxu0 0.0
        %1048 = vmatpush1.msra.mxu0 0.0
        %1049 = vmatprep.subr.mxu0 0.0
        %1050 = vmatpush1.msra.mxu0 0.0
        %1051 = vmatprep.subr.mxu0 0.0
        %1052 = vmatpush1.msra.mxu0 0.0
        %1053 = vmatprep.subr.mxu0 0.0
        %1054 = vmatpush1.msra.mxu0 0.0
        %1055 = vmatprep.subr.mxu0 0.0
        %1056 = vmatpush1.msra.mxu0 0.0
        %1057 = vmatprep.subr.mxu0 0.0
        %1058 = vmatpush1.msra.mxu0 0.0
        %1059 = vmatprep.subr.mxu0 0.0
        %1060 = vmatpush1.msra.mxu0 0.0
        %1061 = vmatprep.subr.mxu0 0.0
        %1062 = vmatpush1.msra.mxu0 0.0
        %1063 = vmatprep.subr.mxu0 0.0
        %1064 = vmatpush1.msra.mxu0 0.0
        %1065 = vmatprep.subr.mxu0 0.0
        %1066 = vmatpush1.msra.mxu0 %v1030
        %1067 = vmatprep.subr.mxu0 0.0
        %1068 = vmatpush2.msra.mxu0 0.0
        %1069 = vmatprep.subr.mxu0 0.0
        %1070 = vmatpush2.msra.mxu0 0.0
        %1071 = vmatprep.subr.mxu0 0.0
        %1072 = vmatpush2.msra.mxu0 0.0
        %1073 = vmatprep.subr.mxu0 0.0
        %1074 = vmatpush2.msra.mxu0 0.0
        %1075 = vmatprep.subr.mxu0 0.0
        %1076 = vmatpush2.msra.mxu0 0.0
        %1077 = vmatprep.subr.mxu0 0.0
        %1078 = vmatpush2.msra.mxu0 0.0
        %1079 = vmatprep.subr.mxu0 0.0
        %1080 = vmatpush2.msra.mxu0 0.0
        %1081 = vmatprep.subr.mxu0 0.0
        %1082 = vmatpush2.msra.mxu0 0.0
        %1083 = vmatprep.subr.mxu0 0.0
        %1084 = vmatpush2.msra.mxu0 0.0
        %1085 = vmatprep.subr.mxu0 0.0
        %1086 = vmatpush2.msra.mxu0 0.0
        %1087 = vmatprep.subr.mxu0 0.0
        %1088 = vmatpush2.msra.mxu0 0.0
        %1089 = vmatprep.subr.mxu0 0.0
        %1090 = vmatpush2.msra.mxu0 0.0
        %1091 = vmatprep.subr.mxu0 0.0
        %1092 = vmatpush2.msra.mxu0 0.0
        %1093 = vmatprep.subr.mxu0 0.0
        %1094 = vmatpush2.msra.mxu0 0.0
        %1095 = vmatprep.subr.mxu0 0.0
        %1096 = vmatpush2.msra.mxu0 0.0
        %1097 = vmatprep.subr.mxu0 0.0
        %1098 = vmatpush2.msra.mxu0 0.0
        %1099 = vmatprep.mubr.f32.mxu0 0.0
        %1100 = vmatmul.mubr.f32.gmra.mxu0 %v1033
        %v1101 = vpop.f32.mrf.mxu0
        %v1102 = vadd.f32 0.0, %v1101
        %v1103 = vpop.f32.mrf.mxu0
        %1104 = vdwg.mxu0
        %1105 = vrot.lane.b32.xlu0 %v600, 104
        %v1106 = vpop.permute.xlu0 %1105
        %1107 = vrot.lane.b32.xlu0 %v600, 72
        %v1108 = vpop.permute.xlu0 %1107
        %v1109 = vsel %vm613, %v1106, 0
        %v1111 = vsel %vm613, %v1108, 0
        %1113 = vmatprep.subr.mxu0 0.0
        %1114 = vmatpush1.xpose.msra.mxu0 0.0
        %1115 = vmatprep.subr.mxu0 0.0
        %1116 = vmatpush1.xpose.msra.mxu0 0.0
        %1117 = vmatprep.subr.mxu0 0.0
        %1118 = vmatpush1.xpose.msra.mxu0 0.0
        %1119 = vmatprep.subr.mxu0 0.0
        %1120 = vmatpush1.xpose.msra.mxu0 0.0
        %1121 = vmatprep.subr.mxu0 0.0
        %1122 = vmatpush1.xpose.msra.mxu0 0.0
        %1123 = vmatprep.subr.mxu0 0.0
        %1124 = vmatpush1.xpose.msra.mxu0 0.0
        %1125 = vmatprep.subr.mxu0 0.0
        %1126 = vmatpush1.xpose.msra.mxu0 0.0
        %1127 = vmatprep.subr.mxu0 0.0
        %1128 = vmatpush1.xpose.msra.mxu0 0.0
        %1129 = vmatprep.subr.mxu0 0.0
        %1130 = vmatpush1.xpose.msra.mxu0 0.0
        %1131 = vmatprep.subr.mxu0 0.0
        %1132 = vmatpush1.xpose.msra.mxu0 0.0
        %1133 = vmatprep.subr.mxu0 0.0
        %1134 = vmatpush1.xpose.msra.mxu0 0.0
        %1135 = vmatprep.subr.mxu0 0.0
        %1136 = vmatpush1.xpose.msra.mxu0 0.0
        %1137 = vmatprep.subr.mxu0 0.0
        %1138 = vmatpush1.xpose.msra.mxu0 0.0
        %1139 = vmatprep.subr.mxu0 0.0
        %1140 = vmatpush1.xpose.msra.mxu0 0.0
        %1141 = vmatprep.subr.mxu0 0.0
        %1142 = vmatpush1.xpose.msra.mxu0 0.0
        %1143 = vmatprep.subr.mxu0 0.0
        %1144 = vmatpush1.xpose.msra.mxu0 %v1111
        %1145 = vmatprep.subr.mxu0 0.0
        %1146 = vmatpush2.xpose.msra.mxu0 0.0
        %1147 = vmatprep.subr.mxu0 0.0
        %1148 = vmatpush2.xpose.msra.mxu0 0.0
        %1149 = vmatprep.subr.mxu0 0.0
        %1150 = vmatpush2.xpose.msra.mxu0 0.0
        %1151 = vmatprep.subr.mxu0 0.0
        %1152 = vmatpush2.xpose.msra.mxu0 0.0
        %1153 = vmatprep.subr.mxu0 0.0
        %1154 = vmatpush2.xpose.msra.mxu0 0.0
        %1155 = vmatprep.subr.mxu0 0.0
        %1156 = vmatpush2.xpose.msra.mxu0 0.0
        %1157 = vmatprep.subr.mxu0 0.0
        %1158 = vmatpush2.xpose.msra.mxu0 0.0
        %1159 = vmatprep.subr.mxu0 0.0
        %1160 = vmatpush2.xpose.msra.mxu0 0.0
        %1161 = vmatprep.subr.mxu0 0.0
        %1162 = vmatpush2.xpose.msra.mxu0 0.0
        %1163 = vmatprep.subr.mxu0 0.0
        %1164 = vmatpush2.xpose.msra.mxu0 0.0
        %1165 = vmatprep.subr.mxu0 0.0
        %1166 = vmatpush2.xpose.msra.mxu0 0.0
        %1167 = vmatprep.subr.mxu0 0.0
        %1168 = vmatpush2.xpose.msra.mxu0 0.0
        %1169 = vmatprep.subr.mxu0 0.0
        %1170 = vmatpush2.xpose.msra.mxu0 0.0
        %1171 = vmatprep.subr.mxu0 0.0
        %1172 = vmatpush2.xpose.msra.mxu0 0.0
        %1173 = vmatprep.subr.mxu0 0.0
        %1174 = vmatpush2.xpose.msra.mxu0 0.0
        %1175 = vmatprep.subr.mxu0 0.0
        %1176 = vmatpush2.xpose.msra.mxu0 0.0
        %1177 = vmatprep.mubr.f32.mxu0 0.0
        %1178 = vmatmul.mubr.f32.gmra.mxu0 %v1109
        %v1179 = vpop.f32.mrf.mxu0
        %v1180 = vadd.f32 %v608, %v1179
        %v1181 = vpop.f32.mrf.mxu0
        %1182 = vdwg.mxu0
        %v1183 = vsel %vm613, %v1180, -inf
        %1184 = vmax.xlane.f32.xlu0 %v1183
        %v1185 = vpop.xlane.xlu0 %1184
        %v1186 = vsub.f32 %v1180, %v1185
        %v1187 = vmul.f32 %v1186, 1.442695
        %v1188 = vpow.pop %v1187
        %v1189 = vsel %vm613, %v1188, 0.0
        %1190 = vadd.xlane.f32.xlu0 %v1189
        %v1191 = vpop.xlane.xlu0 %1190
        %v1192 = vrcp.pop %v1191
        %v1193 = vmul.f32 %v1188, %v1192
        %1194 = vrot.lane.b32.xlu0 %v600, 40
        %v1195 = vpop.permute.xlu0 %1194
        %v1198 = vsel %vm613, %v1193, 0
        %1200 = vmatprep.subr.mxu0 0.0
        %1201 = vmatpush1.msra.mxu0 0.0
        %1202 = vmatprep.subr.mxu0 0.0
        %1203 = vmatpush1.msra.mxu0 0.0
        %1204 = vmatprep.subr.mxu0 0.0
        %1205 = vmatpush1.msra.mxu0 0.0
        %1206 = vmatprep.subr.mxu0 0.0
        %1207 = vmatpush1.msra.mxu0 0.0
        %1208 = vmatprep.subr.mxu0 0.0
        %1209 = vmatpush1.msra.mxu0 0.0
        %1210 = vmatprep.subr.mxu0 0.0
        %1211 = vmatpush1.msra.mxu0 0.0
        %1212 = vmatprep.subr.mxu0 0.0
        %1213 = vmatpush1.msra.mxu0 0.0
        %1214 = vmatprep.subr.mxu0 0.0
        %1215 = vmatpush1.msra.mxu0 0.0
        %1216 = vmatprep.subr.mxu0 0.0
        %1217 = vmatpush1.msra.mxu0 0.0
        %1218 = vmatprep.subr.mxu0 0.0
        %1219 = vmatpush1.msra.mxu0 0.0
        %1220 = vmatprep.subr.mxu0 0.0
        %1221 = vmatpush1.msra.mxu0 0.0
        %1222 = vmatprep.subr.mxu0 0.0
        %1223 = vmatpush1.msra.mxu0 0.0
        %1224 = vmatprep.subr.mxu0 0.0
        %1225 = vmatpush1.msra.mxu0 0.0
        %1226 = vmatprep.subr.mxu0 0.0
        %1227 = vmatpush1.msra.mxu0 0.0
        %1228 = vmatprep.subr.mxu0 0.0
        %1229 = vmatpush1.msra.mxu0 0.0
        %1230 = vmatprep.subr.mxu0 0.0
        %1231 = vmatpush1.msra.mxu0 %v1195
        %1232 = vmatprep.subr.mxu0 0.0
        %1233 = vmatpush2.msra.mxu0 0.0
        %1234 = vmatprep.subr.mxu0 0.0
        %1235 = vmatpush2.msra.mxu0 0.0
        %1236 = vmatprep.subr.mxu0 0.0
        %1237 = vmatpush2.msra.mxu0 0.0
        %1238 = vmatprep.subr.mxu0 0.0
        %1239 = vmatpush2.msra.mxu0 0.0
        %1240 = vmatprep.subr.mxu0 0.0
        %1241 = vmatpush2.msra.mxu0 0.0
        %1242 = vmatprep.subr.mxu0 0.0
        %1243 = vmatpush2.msra.mxu0 0.0
        %1244 = vmatprep.subr.mxu0 0.0
        %1245 = vmatpush2.msra.mxu0 0.0
        %1246 = vmatprep.subr.mxu0 0.0
        %1247 = vmatpush2.msra.mxu0 0.0
        %1248 = vmatprep.subr.mxu0 0.0
        %1249 = vmatpush2.msra.mxu0 0.0
        %1250 = vmatprep.subr.mxu0 0.0
        %1251 = vmatpush2.msra.mxu0 0.0
        %1252 = vmatprep.subr.mxu0 0.0
        %1253 = vmatpush2.msra.mxu0 0.0
        %1254 = vmatprep.subr.mxu0 0.0
        %1255 = vmatpush2.msra.mxu0 0.0
        %1256 = vmatprep.subr.mxu0 0.0
        %1257 = vmatpush2.msra.mxu0 0.0
        %1258 = vmatprep.subr.mxu0 0.0
        %1259 = vmatpush2.msra.mxu0 0.0
        %1260 = vmatprep.subr.mxu0 0.0
        %1261 = vmatpush2.msra.mxu0 0.0
        %1262 = vmatprep.subr.mxu0 0.0
        %1263 = vmatpush2.msra.mxu0 0.0
        %1264 = vmatprep.mubr.f32.mxu0 0.0
        %1265 = vmatmul.mubr.f32.gmra.mxu0 %v1198
        %v1266 = vpop.f32.mrf.mxu0
        %v1267 = vadd.f32 0.0, %v1266
        %v1268 = vpop.f32.mrf.mxu0
        %1269 = vdwg.mxu0
        %1271 = vrot.lane.b32.xlu0 %v937, 8
        %v1272 = vpop.permute.xlu0 %1271
        %1275 = vrot.lane.b32.xlu0 %v1102, 16
        %v1276 = vpop.permute.xlu0 %1275
        %1279 = vrot.lane.b32.xlu0 %v1267, 24
        %v1280 = vpop.permute.xlu0 %1279
        %v1282 = vsel %vm613, %v772, %v1272
        %vm1283 = vcmask 130048
        %v1284 = vsel %vm1283, %v1282, %v1276
        %vm1285 = vcmask 195584
        %v1286 = vsel %vm1285, %v1284, %v1280
        %v1287 = vld [vmem:[%s4] sm:$0xff]
        %v1288 = vld [vmem:[%s4 + $0x8] sm:$0xff]
        %v1289 = vld [vmem:[%s4 + $0x10] sm:$0xff]
        %v1290 = vld [vmem:[%s4 + $0x18] sm:$0xff]
        %v1291 = vld [vmem:[%s5] sm:$0x1]
        %v1293 = vlaneseq
        %v1294 = vshrl.u32 %v1293, 7
        %v1295 = vsub.s32 0, %v1294
        %v1296 = vrot.slane %v1291, %v1295
        %v1299 = vsel %vm529, %v1286, 0
        %1301 = vmatprep.subr.mxu0 0.0
        %1302 = vmatpush1.msra.mxu0 0.0
        %1303 = vmatprep.subr.mxu0 0.0
        %1304 = vmatpush1.msra.mxu0 0.0
        %1305 = vmatprep.subr.mxu0 0.0
        %1306 = vmatpush1.msra.mxu0 0.0
        %1307 = vmatprep.subr.mxu0 0.0
        %1308 = vmatpush1.msra.mxu0 0.0
        %1309 = vmatprep.subr.mxu0 0.0
        %1310 = vmatpush1.msra.mxu0 0.0
        %1311 = vmatprep.subr.mxu0 0.0
        %1312 = vmatpush1.msra.mxu0 0.0
        %1313 = vmatprep.subr.mxu0 0.0
        %1314 = vmatpush1.msra.mxu0 0.0
        %1315 = vmatprep.subr.mxu0 0.0
        %1316 = vmatpush1.msra.mxu0 0.0
        %1317 = vmatprep.subr.mxu0 0.0
        %1318 = vmatpush1.msra.mxu0 0.0
        %1319 = vmatprep.subr.mxu0 0.0
        %1320 = vmatpush1.msra.mxu0 0.0
        %1321 = vmatprep.subr.mxu0 0.0
        %1322 = vmatpush1.msra.mxu0 0.0
        %1323 = vmatprep.subr.mxu0 0.0
        %1324 = vmatpush1.msra.mxu0 0.0
        %1325 = vmatprep.subr.mxu0 0.0
        %1326 = vmatpush1.msra.mxu0 %v1290
        %1327 = vmatprep.subr.mxu0 0.0
        %1328 = vmatpush1.msra.mxu0 %v1289
        %1329 = vmatprep.subr.mxu0 0.0
        %1330 = vmatpush1.msra.mxu0 %v1288
        %1331 = vmatprep.subr.mxu0 0.0
        %1332 = vmatpush1.msra.mxu0 %v1287
        %1333 = vmatprep.subr.mxu0 0.0
        %1334 = vmatpush2.msra.mxu0 0.0
        %1335 = vmatprep.subr.mxu0 0.0
        %1336 = vmatpush2.msra.mxu0 0.0
        %1337 = vmatprep.subr.mxu0 0.0
        %1338 = vmatpush2.msra.mxu0 0.0
        %1339 = vmatprep.subr.mxu0 0.0
        %1340 = vmatpush2.msra.mxu0 0.0
        %1341 = vmatprep.subr.mxu0 0.0
        %1342 = vmatpush2.msra.mxu0 0.0
        %1343 = vmatprep.subr.mxu0 0.0
        %1344 = vmatpush2.msra.mxu0 0.0
        %1345 = vmatprep.subr.mxu0 0.0
        %1346 = vmatpush2.msra.mxu0 0.0
        %1347 = vmatprep.subr.mxu0 0.0
        %1348 = vmatpush2.msra.mxu0 0.0
        %1349 = vmatprep.subr.mxu0 0.0
        %1350 = vmatpush2.msra.mxu0 0.0
        %1351 = vmatprep.subr.mxu0 0.0
        %1352 = vmatpush2.msra.mxu0 0.0
        %1353 = vmatprep.subr.mxu0 0.0
        %1354 = vmatpush2.msra.mxu0 0.0
        %1355 = vmatprep.subr.mxu0 0.0
        %1356 = vmatpush2.msra.mxu0 0.0
        %1357 = vmatprep.subr.mxu0 0.0
        %1358 = vmatpush2.msra.mxu0 0.0
        %1359 = vmatprep.subr.mxu0 0.0
        %1360 = vmatpush2.msra.mxu0 0.0
        %1361 = vmatprep.subr.mxu0 0.0
        %1362 = vmatpush2.msra.mxu0 0.0
        %1363 = vmatprep.subr.mxu0 0.0
        %1364 = vmatpush2.msra.mxu0 0.0
        %1365 = vmatprep.mubr.f32.mxu0 0.0
        %1366 = vmatmul.mubr.f32.gmra.mxu0 %v1299
        %v1367 = vpop.f32.mrf.mxu0
        %v1368 = vadd.f32 %v1296, %v1367
        %v1369 = vpop.f32.mrf.mxu0
        %1370 = vdwg.mxu0
        %v1371 = vld [vmem:[%s6] sm:$0x1]
        %v1372 = vld [vmem:[%s7] sm:$0x1]
        %v1373 = vsel %vm529, %v1368, 0.0
        %1374 = vadd.xlane.f32.xlu0 %v1373
        %v1375 = vpop.xlane.xlu0 %1374
        %v1376 = vrcp.pop 32.0
        %v1377 = vmul.f32 %v1375, %v1376
        %v1378 = vsub.f32 %v1368, %v1377
        %v1379 = vmul.f32 %v1378, %v1378
        %v1380 = vsel %vm529, %v1379, 0.0
        %1381 = vadd.xlane.f32.xlu0 %v1380
        %v1382 = vpop.xlane.xlu0 %1381
        %v1383 = vmul.f32 %v1382, %v1376
        %v1384 = vadd.f32 %v1383, 1e-12
        %v1385 = vrsqrt.pop %v1384
        %v1386 = vmul.f32 %v1378, %v1385
        %v1388 = vlaneseq
        %v1389 = vshrl.u32 %v1388, 7
        %v1390 = vsub.s32 0, %v1389
        %v1391 = vrot.slane %v1371, %v1390
        %v1393 = vmul.f32 %v1386, %v1391
        %v1395 = vlaneseq
        %v1396 = vshrl.u32 %v1395, 7
        %v1397 = vsub.s32 0, %v1396
        %v1398 = vrot.slane %v1372, %v1397
        %v1400 = vadd.f32 %v1393, %v1398
        %v1401 = vld [vmem:[%s8] sm:$0xff]
        %v1402 = vld [vmem:[%s8 + $0x8] sm:$0xff]
        %v1403 = vld [vmem:[%s8 + $0x10] sm:$0xff]
        %v1404 = vld [vmem:[%s8 + $0x18] sm:$0xff]
        %v1405 = vld [vmem:[%s9] sm:$0x1]
        %v1407 = vlaneseq
        %v1408 = vshrl.u32 %v1407, 7
        %v1409 = vsub.s32 0, %v1408
        %v1410 = vrot.slane %v1405, %v1409
        %v1413 = vsel %vm529, %v1400, 0
        %1415 = vmatprep.subr.mxu0 0.0
        %1416 = vmatpush1.msra.mxu0 0.0
        %1417 = vmatprep.subr.mxu0 0.0
        %1418 = vmatpush1.msra.mxu0 0.0
        %1419 = vmatprep.subr.mxu0 0.0
        %1420 = vmatpush1.msra.mxu0 0.0
        %1421 = vmatprep.subr.mxu0 0.0
        %1422 = vmatpush1.msra.mxu0 0.0
        %1423 = vmatprep.subr.mxu0 0.0
        %1424 = vmatpush1.msra.mxu0 0.0
        %1425 = vmatprep.subr.mxu0 0.0
        %1426 = vmatpush1.msra.mxu0 0.0
        %1427 = vmatprep.subr.mxu0 0.0
        %1428 = vmatpush1.msra.mxu0 0.0
        %1429 = vmatprep.subr.mxu0 0.0
        %1430 = vmatpush1.msra.mxu0 0.0
        %1431 = vmatprep.subr.mxu0 0.0
        %1432 = vmatpush1.msra.mxu0 0.0
        %1433 = vmatprep.subr.mxu0 0.0
        %1434 = vmatpush1.msra.mxu0 0.0
        %1435 = vmatprep.subr.mxu0 0.0
        %1436 = vmatpush1.msra.mxu0 0.0
        %1437 = vmatprep.subr.mxu0 0.0
        %1438 = vmatpush1.msra.mxu0 0.0
        %1439 = vmatprep.subr.mxu0 0.0
        %1440 = vmatpush1.msra.mxu0 %v1404
        %1441 = vmatprep.subr.mxu0 0.0
        %1442 = vmatpush1.msra.mxu0 %v1403
        %1443 = vmatprep.subr.mxu0 0.0
        %1444 = vmatpush1.msra.mxu0 %v1402
        %1445 = vmatprep.subr.mxu0 0.0
        %1446 = vmatpush1.msra.mxu0 %v1401
        %1447 = vmatprep.subr.mxu0 0.0
        %1448 = vmatpush2.msra.mxu0 0.0
        %1449 = vmatprep.subr.mxu0 0.0
        %1450 = vmatpush2.msra.mxu0 0.0
        %1451 = vmatprep.subr.mxu0 0.0
        %1452 = vmatpush2.msra.mxu0 0.0
        %1453 = vmatprep.subr.mxu0 0.0
        %1454 = vmatpush2.msra.mxu0 0.0
        %1455 = vmatprep.subr.mxu0 0.0
        %1456 = vmatpush2.msra.mxu0 0.0
        %1457 = vmatprep.subr.mxu0 0.0
        %1458 = vmatpush2.msra.mxu0 0.0
        %1459 = vmatprep.subr.mxu0 0.0
        %1460 = vmatpush2.msra.mxu0 0.0
        %1461 = vmatprep.subr.mxu0 0.0
        %1462 = vmatpush2.msra.mxu0 0.0
        %1463 = vmatprep.subr.mxu0 0.0
        %1464 = vmatpush2.msra.mxu0 0.0
        %1465 = vmatprep.subr.mxu0 0.0
        %1466 = vmatpush2.msra.mxu0 0.0
        %1467 = vmatprep.subr.mxu0 0.0
        %1468 = vmatpush2.msra.mxu0 0.0
        %1469 = vmatprep.subr.mxu0 0.0
        %1470 = vmatpush2.msra.mxu0 0.0
        %1471 = vmatprep.subr.mxu0 0.0
        %1472 = vmatpush2.msra.mxu0 0.0
        %1473 = vmatprep.subr.mxu0 0.0
        %1474 = vmatpush2.msra.mxu0 0.0
        %1475 = vmatprep.subr.mxu0 0.0
        %1476 = vmatpush2.msra.mxu0 0.0
        %1477 = vmatprep.subr.mxu0 0.0
        %1478 = vmatpush2.msra.mxu0 0.0
        %1479 = vmatprep.mubr.f32.mxu0 0.0
        %1480 = vmatmul.mubr.f32.gmra.mxu0 %v1413
        %v1481 = vpop.f32.mrf.mxu0
        %v1482 = vadd.f32 %v1410, %v1481
        %v1483 = vpop.f32.mrf.mxu0
        %1484 = vdwg.mxu0
        %v1485 = vmax.f32 %v1482, 0.0
        %v1486 = vld [vmem:[%s10] sm:$0xff]
        %v1487 = vld [vmem:[%s10 + $0x8] sm:$0xff]
        %v1488 = vld [vmem:[%s10 + $0x10] sm:$0xff]
        %v1489 = vld [vmem:[%s10 + $0x18] sm:$0xff]
        %v1490 = vld [vmem:[%s10 + $0x20] sm:$0xff]
        %v1491 = vld [vmem:[%s10 + $0x28] sm:$0xff]
        %v1492 = vld [vmem:[%s10 + $0x30] sm:$0xff]
        %v1493 = vld [vmem:[%s10 + $0x38] sm:$0xff]
        %v1494 = vld [vmem:[%s11] sm:$0x1]
        %v1496 = vlaneseq
        %v1497 = vshrl.u32 %v1496, 7
        %v1498 = vsub.s32 0, %v1497
        %v1499 = vrot.slane %v1494, %v1498
        %vm1501 = vcmask 523264
        %v1503 = vsel %vm1501, %v1485, 0
        %1505 = vmatprep.subr.mxu0 0.0
        %1506 = vmatpush1.msra.mxu0 0.0
        %1507 = vmatprep.subr.mxu0 0.0
        %1508 = vmatpush1.msra.mxu0 0.0
        %1509 = vmatprep.subr.mxu0 0.0
        %1510 = vmatpush1.msra.mxu0 0.0
        %1511 = vmatprep.subr.mxu0 0.0
        %1512 = vmatpush1.msra.mxu0 0.0
        %1513 = vmatprep.subr.mxu0 0.0
        %1514 = vmatpush1.msra.mxu0 0.0
        %1515 = vmatprep.subr.mxu0 0.0
        %1516 = vmatpush1.msra.mxu0 0.0
        %1517 = vmatprep.subr.mxu0 0.0
        %1518 = vmatpush1.msra.mxu0 0.0
        %1519 = vmatprep.subr.mxu0 0.0
        %1520 = vmatpush1.msra.mxu0 0.0
        %1521 = vmatprep.subr.mxu0 0.0
        %1522 = vmatpush1.msra.mxu0 %v1493
        %1523 = vmatprep.subr.mxu0 0.0
        %1524 = vmatpush1.msra.mxu0 %v1492
        %1525 = vmatprep.subr.mxu0 0.0
        %1526 = vmatpush1.msra.mxu0 %v1491
        %1527 = vmatprep.subr.mxu0 0.0
        %1528 = vmatpush1.msra.mxu0 %v1490
        %1529 = vmatprep.subr.mxu0 0.0
        %1530 = vmatpush1.msra.mxu0 %v1489
        %1531 = vmatprep.subr.mxu0 0.0
        %1532 = vmatpush1.msra.mxu0 %v1488
        %1533 = vmatprep.subr.mxu0 0.0
        %1534 = vmatpush1.msra.mxu0 %v1487
        %1535 = vmatprep.subr.mxu0 0.0
        %1536 = vmatpush1.msra.mxu0 %v1486
        %1537 = vmatprep.subr.mxu0 0.0
        %1538 = vmatpush2.msra.mxu0 0.0
        %1539 = vmatprep.subr.mxu0 0.0
        %1540 = vmatpush2.msra.mxu0 0.0
        %1541 = vmatprep.subr.mxu0 0.0
        %1542 = vmatpush2.msra.mxu0 0.0
        %1543 = vmatprep.subr.mxu0 0.0
        %1544 = vmatpush2.msra.mxu0 0.0
        %1545 = vmatprep.subr.mxu0 0.0
        %1546 = vmatpush2.msra.mxu0 0.0
        %1547 = vmatprep.subr.mxu0 0.0
        %1548 = vmatpush2.msra.mxu0 0.0
        %1549 = vmatprep.subr.mxu0 0.0
        %1550 = vmatpush2.msra.mxu0 0.0
        %1551 = vmatprep.subr.mxu0 0.0
        %1552 = vmatpush2.msra.mxu0 0.0
        %1553 = vmatprep.subr.mxu0 0.0
        %1554 = vmatpush2.msra.mxu0 0.0
        %1555 = vmatprep.subr.mxu0 0.0
        %1556 = vmatpush2.msra.mxu0 0.0
        %1557 = vmatprep.subr.mxu0 0.0
        %1558 = vmatpush2.msra.mxu0 0.0
        %1559 = vmatprep.subr.mxu0 0.0
        %1560 = vmatpush2.msra.mxu0 0.0
        %1561 = vmatprep.subr.mxu0 0.0
        %1562 = vmatpush2.msra.mxu0 0.0
        %1563 = vmatprep.subr.mxu0 0.0
        %1564 = vmatpush2.msra.mxu0 0.0
        %1565 = vmatprep.subr.mxu0 0.0
        %1566 = vmatpush2.msra.mxu0 0.0
        %1567 = vmatprep.subr.mxu0 0.0
        %1568 = vmatpush2.msra.mxu0 0.0
        %1569 = vmatprep.mubr.f32.mxu0 0.0
        %1570 = vmatmul.mubr.f32.gmra.mxu0 %v1503
        %v1571 = vpop.f32.mrf.mxu0
        %v1572 = vadd.f32 %v1499, %v1571
        %v1573 = vpop.f32.mrf.mxu0
        %1574 = vdwg.mxu0
        %v1575 = vld [vmem:[%s12] sm:$0x1]
        %v1576 = vld [vmem:[%s13] sm:$0x1]
        %v1577 = vsel %vm529, %v1572, 0.0
        %1578 = vadd.xlane.f32.xlu0 %v1577
        %v1579 = vpop.xlane.xlu0 %1578
        %v1580 = vmul.f32 %v1579, %v1376
        %v1581 = vsub.f32 %v1572, %v1580
        %v1582 = vmul.f32 %v1581, %v1581
        %v1583 = vsel %vm529, %v1582, 0.0
        %1584 = vadd.xlane.f32.xlu0 %v1583
        %v1585 = vpop.xlane.xlu0 %1584
        %v1586 = vmul.f32 %v1585, %v1376
        %v1587 = vadd.f32 %v1586, 1e-12
        %v1588 = vrsqrt.pop %v1587
        %v1589 = vmul.f32 %v1581, %v1588
        %v1591 = vlaneseq
        %v1592 = vshrl.u32 %v1591, 7
        %v1593 = vsub.s32 0, %v1592
        %v1594 = vrot.slane %v1575, %v1593
        %v1596 = vmul.f32 %v1589, %v1594
        %v1598 = vlaneseq
        %v1599 = vshrl.u32 %v1598, 7
        %v1600 = vsub.s32 0, %v1599
        %v1601 = vrot.slane %v1576, %v1600
        %v1603 = vadd.f32 %v1596, %v1601
        %1604 = vst.msk [vmem:[%s516] sm:$0xff] %vm529, %v1603
        %s1605 = sand.u32 %s346, 1
        %s1606 = scalar_lea.sflag [#allocation4], %s1605
        %s1607 = sand.u32 %s346, 1
        %s1608 = smul.addr %s1607, 8
        %s1609 = scalar_lea.vmem [#allocation7], %s1608
        // Predicated region
        $region85: #{tpu_custom_call.1} parent=75 // pred_check
          %p1610 = pneg %p356
        $region86: #{tpu_custom_call.1} parent=75 // pred_check_branch
          %1612 = sbr.rel (%p1610) target = $region88
        $region87: #{tpu_custom_call.1} parent=75 // pred_region
          %s1614 = ssub.s32 128, 128
          %1615 = vsyncadd %s1606, %s1614
          %s1616 = smul.addr %s34, 128
          %s1617 = scalar_lea.hbm %s14, %s1616
          %s1619 = sshll.u32 %s1609, 4
          %s1620 = int_to_ptr.vmem [resolvable:$true] %s1619
          %1622 = dma.vmem_to_hbm [thread:$0]  %s1620, 128, %s1617, %s1606
        $region88: #{tpu_custom_call.1} parent=75 // pred_fallthru
          _
      $region76: #{tpu_custom_call.1} parent=5 // pred_fallthru
        _
      %p1623 = scmp.le.s32.totalorder 2, %s29
      // Predicated region
      $region89: #{tpu_custom_call.1} parent=5 // pred_check
        %p1624 = pneg %p1623
      $region90: #{tpu_custom_call.1} parent=5 // pred_check_branch
        %1626 = sbr.rel (%p1624) target = $region92
      $region91: #{tpu_custom_call.1} parent=5 // pred_region
        %s1627 = ssub.s32 %s29, 2
        // Predicated region
        $region93: #{tpu_custom_call.1} parent=91 // pred_check
          %p1628 = pneg %p362
        $region94: #{tpu_custom_call.1} parent=91 // pred_check_branch
          %1630 = sbr.rel (%p1628) target = $region96
        $region95: #{tpu_custom_call.1} parent=91 // pred_region
          %s1631 = sand.u32 %s347, 1
          %s1632 = scalar_lea.sflag [#allocation4], %s1631
          %s1633 = sand.u32 %s347, 1
          %s1634 = smul.addr %s1633, 8
          %s1635 = scalar_lea.vmem [#allocation7], %s1634
          %1636 = dma.done %s1632, 128
        $region96: #{tpu_custom_call.1} parent=91 // pred_fallthru
          _
      $region92: #{tpu_custom_call.1} parent=5 // pred_fallthru
        _
    $region6: #{tpu_custom_call.1} parent=1 // loop_footer
      %s33 = sadd.s32 1, %s29
    $region7: #{tpu_custom_call.1} parent=1 // loop_footer_branch
      %28 = sbr.rel target = $region3
    $region8: #{tpu_custom_call.1} parent=1 // loop_exit
      _
    %1637 = vsyncpa [#allocation3], 1
    %s1638 = scalar_lea.sflag [#allocation3], 1
    %1639 = vsyncpa %s1638, 1
    %1640 = vsyncpa [#allocation6], 1
    %s1641 = scalar_lea.sflag [#allocation6], 1
    %1642 = vsyncpa %s1641, 1
    %1643 = vsyncpa [#allocation4], 1
    %s1644 = scalar_lea.sflag [#allocation4], 1
    %1645 = vsyncpa %s1644, 1

</llo_original>
